<compile_context>
chip_gen: v7x
topology: tpu7x:2x2x1
jax: 0.10.0
libtpu: 0.0.40
codegen_flags: <defaults>
</compile_context>

<pallas_src>
import functools

import jax
import jax.numpy as jnp
from jax.experimental import pallas as pl
from jax.experimental.pallas import tpu as pltpu

LANE = 128
SUBLANE = 16          # bf16 sublane pack; batch is padded to this


def _round_up(v, m):
    return ((v + m - 1) // m) * m


def _vmem_limit(need_bytes):
    # Explicit scoped-VMEM budget: need + 50% headroom, floor 16 MiB, capped at
    # 56 MiB so one setting also fits v7x's 64 MiB/TC.  Models whose residency
    # exceeds the cap should tile the fused N dimension instead of raising it.
    return int(min(max(need_bytes + need_bytes // 2 + (2 << 20), 16 << 20),
                   56 << 20))


# --------------------------- stage 1: input projection -----------------------
# h-independent, so it runs once over all T*B rows at full MXU utilization and
# never enters the serial recurrence.

def _input_proj_kernel(x_ref, w_ref, b_ref, o_ref):
    acc = jnp.dot(x_ref[...], w_ref[...], preferred_element_type=jnp.float32)
    o_ref[...] = (acc + b_ref[...]).astype(o_ref.dtype)


def _input_projection(x2d, w_icat, b_cat, row_tile):
    rows, ip = x2d.shape
    np_ = w_icat.shape[1]
    need = (2 * row_tile * ip * 2        # x blocks (bf16, double-buffered)
            + 2 * ip * np_ * 2           # weight blocks
            + 2 * np_ * 4                # bias blocks
            + 2 * row_tile * np_ * 2     # out blocks (bf16)
            + 2 * row_tile * np_ * 4)    # f32 accumulator headroom
    grid_spec = pltpu.PrefetchScalarGridSpec(
        num_scalar_prefetch=0,
        grid=(rows // row_tile,),
        in_specs=[
            pl.BlockSpec((row_tile, ip), lambda i: (i, 0)),
            pl.BlockSpec((ip, np_), lambda i: (0, 0)),     # resident weight
            pl.BlockSpec((1, np_), lambda i: (0, 0)),      # resident bias
        ],
        out_specs=pl.BlockSpec((row_tile, np_), lambda i: (i, 0)),
    )
    return pl.pallas_call(
        _input_proj_kernel,
        out_shape=jax.ShapeDtypeStruct((rows, np_), jnp.bfloat16),
        grid_spec=grid_spec,
        compiler_params=pltpu.CompilerParams(
            dimension_semantics=("parallel",),
            vmem_limit_bytes=_vmem_limit(need)),
    )(x2d, w_icat, b_cat)


# --------------------------- stage 2: recurrent sequence ---------------------

def _igru_seq_kernel(h0_ref, slab_ref, w_hur_hbm, wh2g_hbm, wg2h_hbm, out_ref,
                     h_scr, w_hur_v, wh2g_v, wg2h_v, sems):
    t_chunk = pl.program_id(1)
    tc = slab_ref.shape[0]          # timesteps per grid step (static)
    hp = h_scr.shape[-1]            # padded hidden width

    # First time-chunk of each batch tile: make the recurrent weights VMEM
    # resident (single copy each -- no double-buffering) and load the initial
    # hidden state into the resident accumulator.
    @pl.when(t_chunk == 0)
    def _():
        copies = (pltpu.make_async_copy(w_hur_hbm, w_hur_v, sems.at[0]),
                  pltpu.make_async_copy(wh2g_hbm, wh2g_v, sems.at[1]),
                  pltpu.make_async_copy(wg2h_hbm, wg2h_v, sems.at[2]))
        for cp in copies:
            cp.start()
        for cp in copies:
            cp.wait()
        h_scr[...] = h0_ref[...]

    h = h_scr[...]                  # (bt, Hp) f32 carried state
    w_hur = w_hur_v[...]            # (Hp, 2Hp) bf16  [Wh2u|Wh2r]
    wh2g = wh2g_v[...]              # (Hp, Mp)  bf16
    wg2h = wg2h_v[...]              # (Mp, Hp)  bf16

    # Fully-unrolled inner time loop (Tc is small & static); equivalent to
    # lax.fori_loop(..., unroll=True) and keeps slab/out accesses static.
    # Padded lanes stay exact: padded h lanes are 0, padded weight/bias
    # columns are 0, so sigmoid(0)=0.5 gates multiply 0 and stay 0.
    for i in range(tc):
        slab = slab_ref[i].astype(jnp.float32)          # (bt, 2Hp+Mp) pre-acts
        h_slab = jnp.dot(h.astype(jnp.bfloat16), w_hur,
                         preferred_element_type=jnp.float32)
        ur = jax.nn.sigmoid(slab[:, :2 * hp] + h_slab)  # fused u|r gates (f32)
        u = ur[:, :hp]
        r = ur[:, hp:]
        g = jnp.tanh(slab[:, 2 * hp:] +
                     jnp.dot((r * h).astype(jnp.bfloat16), wh2g,
                             preferred_element_type=jnp.float32))
        gh = jnp.dot(g.astype(jnp.bfloat16), wg2h,
                     preferred_element_type=jnp.float32)
        h = u * h + (1.0 - u) * gh                      # f32 blend
        out_ref[i] = h.astype(out_ref.dtype)

    h_scr[...] = h


@functools.partial(jax.jit, static_argnames=("batch_tile", "time_chunk"))
def igru_sequence(h0, xs, params, *, batch_tile=None, time_chunk=8):
    """Run the IGRU cell over a sequence.

    h0: (B, H) f32 initial hidden state.   xs: (T, B, I) f32 inputs.
    Returns all hidden states, shape (T, B, H) f32.

    batch_tile: None keeps one batch tile (right for 1-TC v5e/v6e).  On v7x,
      pass e.g. padded_B // 2 (a multiple of 16) so the 'parallel' batch axis
      shards across both TensorCores.
    time_chunk: timesteps executed per grid step (amortizes grid overhead).
    """
    T, B, I = xs.shape
    H = h0.shape[1]
    M = params["wi2g"].shape[1]

    Ip, Hp, Mp = _round_up(I, LANE), _round_up(H, LANE), _round_up(M, LANE)
    Np = 2 * Hp + Mp
    Bp = _round_up(B, SUBLANE)
    bt = Bp if batch_tile is None else batch_tile
    assert Bp % bt == 0 and bt % SUBLANE == 0, (
        "batch_tile must be a multiple of 16 dividing the padded batch")
    nb = Bp // bt
    Tc = max(1, min(time_chunk, T))
    Tp = _round_up(T, Tc)
    nt = Tp // Tc
    f32, bf16 = jnp.float32, jnp.bfloat16

    def pad2(w, rows, cols):
        return jnp.zeros((rows, cols), f32).at[:w.shape[0], :w.shape[1]].set(w)

    # ---- padded / fused operands -------------------------------------------
    h0p = jnp.zeros((Bp, Hp), f32).at[:B, :H].set(h0)
    # Streamed activations pre-cast to bf16 (the MXU consumes bf16 anyway;
    # halves HBM traffic and the x double-buffer footprint).
    xsp = jnp.zeros((Tp, Bp, Ip), bf16).at[:T, :B, :I].set(xs.astype(bf16))

    w_icat = jnp.concatenate(
        [pad2(params["wi2u"], Ip, Hp),
         pad2(params["wi2r"], Ip, Hp),
         pad2(params["wi2g"], Ip, Mp)], axis=1).astype(bf16)
    b_cat = jnp.concatenate(
        [pad2(params["bu"], 1, Hp),
         pad2(params["br"], 1, Hp),
         pad2(params["bg"], 1, Mp)], axis=1)                       # f32
    w_hur = jnp.concatenate(
        [pad2(params["wh2u"], Hp, Hp),
         pad2(params["wh2r"], Hp, Hp)], axis=1).astype(bf16)
    wh2g = pad2(params["wh2g"], Hp, Mp).astype(bf16)
    wg2h = pad2(params["wg2h"], Mp, Hp).astype(bf16)

    # ---- stage 1: hoisted, h-independent input projection -------------------
    slab2d = _input_projection(xsp.reshape(Tp * Bp, Ip), w_icat, b_cat,
                               row_tile=Tc * Bp)
    slab = slab2d.reshape(Tp, Bp, Np)                              # bf16

    # ---- stage 2: recurrent sequence kernel ---------------------------------
    w_resident = 2 * (Hp * 2 * Hp + Hp * Mp + Mp * Hp)   # single-buffered bf16
    need = (w_resident
            + bt * Hp * 4                                # carried h
            + 2 * Tc * bt * Np * 2                       # slab double-buffer
            + 2 * Tc * bt * Hp * 4                       # out double-buffer
            + 2 * bt * Hp * 4                            # h0 blocks
            + 6 * bt * Np * 4)                           # f32 temporaries
    # For H, M >= ~2048 also tile the fused N dimension (w_hur columns, wh2g,
    # wg2h) with an extra 'arbitrary' grid axis so `need` stays < ~56 MiB (v7x).

    grid_spec = pltpu.PrefetchScalarGridSpec(
        num_scalar_prefetch=0,
        grid=(nb, nt),
        in_specs=[
            pl.BlockSpec((bt, Hp), lambda b, t: (b, 0)),           # h0
            pl.BlockSpec((Tc, bt, Np), lambda b, t: (t, b, 0)),    # slab stream
            pl.BlockSpec(memory_space=pl.ANY),                     # [Wh2u|Wh2r]
            pl.BlockSpec(memory_space=pl.ANY),                     # Wh2g
            pl.BlockSpec(memory_space=pl.ANY),                     # Wg2h
        ],
        out_specs=pl.BlockSpec((Tc, bt, Hp), lambda b, t: (t, b, 0)),
        scratch_shapes=[
            pltpu.VMEM((bt, Hp), f32),          # carried hidden state
            pltpu.VMEM((Hp, 2 * Hp), bf16),     # resident [Wh2u|Wh2r]
            pltpu.VMEM((Hp, Mp), bf16),         # resident Wh2g
            pltpu.VMEM((Mp, Hp), bf16),         # resident Wg2h
            pltpu.SemaphoreType.DMA((3,)),
        ],
    )

    out = pl.pallas_call(
        _igru_seq_kernel,
        out_shape=jax.ShapeDtypeStruct((Tp, Bp, Hp), f32),
        grid_spec=grid_spec,
        compiler_params=pltpu.CompilerParams(
            dimension_semantics=("parallel", "arbitrary"),
            vmem_limit_bytes=_vmem_limit(need)),
    )(h0p, slab, w_hur, wh2g, wg2h)

    return out[:T, :B, :H]


def igru_cell(hidden, inputs, params):
    """Single-step forward, matching the PyTorch module's forward(hidden, x)."""
    return igru_sequence(hidden, inputs[None], params, time_chunk=1)[0]


# ----------------------------- references & init -----------------------------

def make_params(key, in_features, hidden, mapping):
    """Deterministic init mimicking nn.Linear's U(-1/sqrt(fan_in), ...).
    Weights are stored transposed: (in_dim, out_dim); biases as (1, out)."""
    ks = jax.random.split(key, 10)

    def lin_w(k, fan_in, fan_out):
        b = 1.0 / jnp.sqrt(fan_in)
        return jax.random.uniform(k, (fan_in, fan_out), jnp.float32, -b, b)

    def lin_b(k, fan_in, fan_out):
        b = 1.0 / jnp.sqrt(fan_in)
        return jax.random.uniform(k, (1, fan_out), jnp.float32, -b, b)

    return {
        "wi2r": lin_w(ks[0], in_features, hidden),
        "wh2r": lin_w(ks[1], hidden, hidden),
        "br":   lin_b(ks[2], hidden, hidden),
        "wi2u": lin_w(ks[3], in_features, hidden),
        "wh2u": lin_w(ks[4], hidden, hidden),
        "bu":   lin_b(ks[5], hidden, hidden),
        "wi2g": lin_w(ks[6], in_features, mapping),
        "wh2g": lin_w(ks[7], hidden, mapping),
        "bg":   lin_b(ks[8], hidden, mapping),
        "wg2h": lin_w(ks[9], mapping, hidden),
    }


def _mm_f32(a, w):
    return jnp.dot(a, w, preferred_element_type=jnp.float32)


def igru_reference_sequence_f32(h0, xs, p):
    """Pure f32 reference = the PyTorch module's semantics, unrolled over T."""
    h = h0
    outs = []
    for t in range(xs.shape[0]):
        x = xs[t]
        u = jax.nn.sigmoid(_mm_f32(x, p["wi2u"]) + _mm_f32(h, p["wh2u"]) + p["bu"])
        r = jax.nn.sigmoid(_mm_f32(x, p["wi2r"]) + _mm_f32(h, p["wh2r"]) + p["br"])
        g = jnp.tanh(_mm_f32(x, p["wi2g"]) + _mm_f32(r * h, p["wh2g"]) + p["bg"])
        h = u * h + (1.0 - u) * _mm_f32(g, p["wg2h"])
        outs.append(h)
    return jnp.stack(outs, axis=0)


def igru_reference_sequence_matched(h0, xs, p):
    """Precision-matched reference: bf16 matmul operands, f32 accumulation,
    and the hoisted x-side pre-activations rounded to bf16 (the streamed slab)."""
    bf16, f32 = jnp.bfloat16, jnp.float32

    def mm(a, w):
        return jnp.dot(a.astype(bf16), w.astype(bf16), preferred_element_type=f32)

    def rnd(v):
        return v.astype(bf16).astype(f32)

    h = h0
    outs = []
    for t in range(xs.shape[0]):
        x = xs[t]
        xu = rnd(mm(x, p["wi2u"]) + p["bu"])
        xr = rnd(mm(x, p["wi2r"]) + p["br"])
        xg = rnd(mm(x, p["wi2g"]) + p["bg"])
        u = jax.nn.sigmoid(xu + mm(h, p["wh2u"]))
        r = jax.nn.sigmoid(xr + mm(h, p["wh2r"]))
        g = jnp.tanh(xg + mm(r * h, p["wh2g"]))
        h = u * h + (1.0 - u) * mm(g, p["wg2h"])
        outs.append(h)
    return jnp.stack(outs, axis=0)


if __name__ == "__main__":
    B, I, H, M, T = 8, 16, 32, 24, 6   # batch, in_features, hidden, mapping, steps

    key = jax.random.PRNGKey(0)
    k_param, k_h, k_x = jax.random.split(key, 3)
    params = make_params(k_param, I, H, M)

    h0 = jax.random.normal(k_h, (B, H), jnp.float32)
    xs = jax.random.normal(k_x, (T, B, I), jnp.float32)

    # Sequence kernel (time_chunk=4 also exercises the T -> padded-T path).
    out_seq = jax.block_until_ready(igru_sequence(h0, xs, params, time_chunk=4))
    assert out_seq.shape == (T, B, H)

    # Single-step path == the original module's forward(hidden, inputs).
    out_cell = jax.block_until_ready(igru_cell(h0, xs[0], params))
    assert out_cell.shape == (B, H)

    # Precision-matched reference (bf16 operands / bf16 streamed slab, f32
    # accumulation & elementwise, f32 carried state).
    ref_m = igru_reference_sequence_matched(h0, xs, params)
    assert jnp.allclose(out_seq, ref_m, atol=1e-2, rtol=1e-2), \
        "sequence mismatch vs precision-matched reference"
    assert jnp.allclose(out_cell, ref_m[0], atol=1e-2, rtol=1e-2), \
        "cell mismatch vs precision-matched reference"

    # Loose sanity check against the pure-f32 module semantics (bf16 operand
    # drift accumulates over the T recurrent steps).
    ref_f32 = igru_reference_sequence_f32(h0, xs, params)
    assert jnp.allclose(out_seq, ref_f32, atol=0.2, rtol=0.1), \
        "sequence drifts from f32 reference beyond bf16 budget"

    print("KERNEL_OK")
</pallas_src>

<mosaic_0001>
module attributes {stable_mosaic.version = 11 : i64} {
  func.func @_input_proj_kernel(%arg0: i32, %arg1: memref<64x128xbf16, #tpu.memory_space<vmem>>, %arg2: memref<128x384xbf16, #tpu.memory_space<vmem>>, %arg3: memref<1x384xf32, #tpu.memory_space<vmem>>, %arg4: memref<64x384xbf16, #tpu.memory_space<vmem>>) attributes {dimension_semantics = [#tpu.dimension_semantics<parallel>], iteration_bounds = array<i64: 2>, scalar_prefetch = 0 : i64, scratch_operands = 0 : i64, tpu.core_type = #tpu.core_type<tc>, window_params = [{transform_indices = @transform_0, window_bounds = array<i64: 64, 128>}, {pipeline_mode = #tpu.pipeline_mode<synchronous>, transform_indices = @transform_1, window_bounds = array<i64: 128, 384>}, {pipeline_mode = #tpu.pipeline_mode<synchronous>, transform_indices = @transform_2, window_bounds = array<i64: 1, 384>}, {transform_indices = @transform_3, window_bounds = array<i64: 64, 384>}]} {
    %c0 = arith.constant 0 : index
    %c0_0 = arith.constant 0 : index
    %0 = vector.load %arg1[%c0, %c0_0] : memref<64x128xbf16, #tpu.memory_space<vmem>>, vector<64x128xbf16>
    %c0_1 = arith.constant 0 : index
    %c0_2 = arith.constant 0 : index
    %1 = vector.load %arg2[%c0_1, %c0_2] : memref<128x384xbf16, #tpu.memory_space<vmem>>, vector<128x384xbf16>
    %cst = arith.constant dense<0.000000e+00> : vector<64x384xf32>
    %2 = tpu.matmul %0, %1, %cst {dimension_numbers = #tpu.dot_dimension_numbers<[1], [0], [0], [1], [0, 0, 1, 1], [], []>} : vector<64x128xbf16>, vector<128x384xbf16>, vector<64x384xf32> -> vector<64x384xf32>
    %c0_3 = arith.constant 0 : index
    %c0_4 = arith.constant 0 : index
    %3 = vector.load %arg3[%c0_3, %c0_4] : memref<1x384xf32, #tpu.memory_space<vmem>>, vector<1x384xf32>
    %4 = vector.broadcast %3 : vector<1x384xf32> to vector<64x384xf32>
    %5 = arith.addf %2, %4 : vector<64x384xf32>
    %6 = arith.truncf %5 : vector<64x384xf32> to vector<64x384xbf16>
    %c0_5 = arith.constant 0 : index
    %c0_6 = arith.constant 0 : index
    %7 = vector.load %arg4[%c0_5, %c0_6] : memref<64x384xbf16, #tpu.memory_space<vmem>>, vector<64x384xbf16>
    tpu.vector_store %arg4[%c0_5, %c0_6], %6 {strides = array<i32>} : memref<64x384xbf16, #tpu.memory_space<vmem>>, vector<64x384xbf16>,
    return
  }
  func.func @transform_0(%arg0: i32) -> (i32, i32) {
    %c0_i32 = arith.constant 0 : i32
    %c0_i32_0 = arith.constant 0 : i32
    return %arg0, %c0_i32 : i32, i32
  }
  func.func @transform_1(%arg0: i32) -> (i32, i32) {
    %c0_i32 = arith.constant 0 : i32
    %c0_i32_0 = arith.constant 0 : i32
    %c0_i32_1 = arith.constant 0 : i32
    return %c0_i32, %c0_i32_0 : i32, i32
  }
  func.func @transform_2(%arg0: i32) -> (i32, i32) {
    %c0_i32 = arith.constant 0 : i32
    %c0_i32_0 = arith.constant 0 : i32
    %c0_i32_1 = arith.constant 0 : i32
    return %c0_i32, %c0_i32_0 : i32, i32
  }
  func.func @transform_3(%arg0: i32) -> (i32, i32) {
    %c0_i32 = arith.constant 0 : i32
    %c0_i32_0 = arith.constant 0 : i32
    return %arg0, %c0_i32 : i32, i32
  }
}

module attributes {stable_mosaic.version = 11 : i64} {
  func.func @_igru_seq_kernel(%arg0: i32, %arg1: i32, %arg2: memref<16x128xf32, #tpu.memory_space<vmem>>, %arg3: memref<4x16x384xbf16, #tpu.memory_space<vmem>>, %arg4: memref<128x256xbf16, #tpu.memory_space<any>>, %arg5: memref<128x128xbf16, #tpu.memory_space<any>>, %arg6: memref<128x128xbf16, #tpu.memory_space<any>>, %arg7: memref<4x16x128xf32, #tpu.memory_space<vmem>>, %arg8: memref<16x128xf32, #tpu.memory_space<vmem>>, %arg9: memref<128x256xbf16, #tpu.memory_space<vmem>>, %arg10: memref<128x128xbf16, #tpu.memory_space<vmem>>, %arg11: memref<128x128xbf16, #tpu.memory_space<vmem>>, %arg12: memref<3x!tpu.dma_semaphore, #tpu.memory_space<semaphore_mem>>) attributes {dimension_semantics = [#tpu.dimension_semantics<parallel>, #tpu.dimension_semantics<arbitrary>], iteration_bounds = array<i64: 1, 2>, scalar_prefetch = 0 : i64, scratch_operands = 5 : i64, tpu.core_type = #tpu.core_type<tc>, window_params = [{transform_indices = @transform_0, window_bounds = array<i64: 16, 128>}, {transform_indices = @transform_1, window_bounds = array<i64: 4, 16, 384>}, {}, {}, {}, {transform_indices = @transform_5, window_bounds = array<i64: 4, 16, 128>}]} {
    %c0_i32 = arith.constant 0 : i32
    %0 = arith.cmpi eq, %arg1, %c0_i32 : i32
    %1 = arith.extui %0 : i1 to i32
    %c0_i32_0 = arith.constant 0 : i32
    %2 = arith.cmpi ne, %1, %c0_i32_0 : i32
    scf.if %2 {
      %c0_i32_50 = arith.constant 0 : i32
      %128 = tpu.memref_slice %arg12[%c0_i32_50] : memref<3x!tpu.dma_semaphore, #tpu.memory_space<semaphore_mem>> -> memref<1x!tpu.dma_semaphore, #tpu.memory_space<semaphore_mem>>
      %129 = tpu.memref_squeeze %128 : memref<1x!tpu.dma_semaphore, #tpu.memory_space<semaphore_mem>> -> memref<!tpu.dma_semaphore, #tpu.memory_space<semaphore_mem>>
      tpu.enqueue_dma source(%arg4 : memref<128x256xbf16, #tpu.memory_space<any>>) target(%arg9 : memref<128x256xbf16, #tpu.memory_space<vmem>>) target_semaphore(%129 : memref<!tpu.dma_semaphore, #tpu.memory_space<semaphore_mem>>)
      %c1_i32 = arith.constant 1 : i32
      %130 = tpu.memref_slice %arg12[%c1_i32] : memref<3x!tpu.dma_semaphore, #tpu.memory_space<semaphore_mem>> -> memref<1x!tpu.dma_semaphore, #tpu.memory_space<semaphore_mem>>
      %131 = tpu.memref_squeeze %130 : memref<1x!tpu.dma_semaphore, #tpu.memory_space<semaphore_mem>> -> memref<!tpu.dma_semaphore, #tpu.memory_space<semaphore_mem>>
      tpu.enqueue_dma source(%arg5 : memref<128x128xbf16, #tpu.memory_space<any>>) target(%arg10 : memref<128x128xbf16, #tpu.memory_space<vmem>>) target_semaphore(%131 : memref<!tpu.dma_semaphore, #tpu.memory_space<semaphore_mem>>)
      %c2_i32 = arith.constant 2 : i32
      %132 = tpu.memref_slice %arg12[%c2_i32] : memref<3x!tpu.dma_semaphore, #tpu.memory_space<semaphore_mem>> -> memref<1x!tpu.dma_semaphore, #tpu.memory_space<semaphore_mem>>
      %133 = tpu.memref_squeeze %132 : memref<1x!tpu.dma_semaphore, #tpu.memory_space<semaphore_mem>> -> memref<!tpu.dma_semaphore, #tpu.memory_space<semaphore_mem>>
      tpu.enqueue_dma source(%arg6 : memref<128x128xbf16, #tpu.memory_space<any>>) target(%arg11 : memref<128x128xbf16, #tpu.memory_space<vmem>>) target_semaphore(%133 : memref<!tpu.dma_semaphore, #tpu.memory_space<semaphore_mem>>)
      %c0_i32_51 = arith.constant 0 : i32
      %134 = tpu.memref_slice %arg12[%c0_i32_51] : memref<3x!tpu.dma_semaphore, #tpu.memory_space<semaphore_mem>> -> memref<1x!tpu.dma_semaphore, #tpu.memory_space<semaphore_mem>>
      %135 = tpu.memref_squeeze %134 : memref<1x!tpu.dma_semaphore, #tpu.memory_space<semaphore_mem>> -> memref<!tpu.dma_semaphore, #tpu.memory_space<semaphore_mem>>
      tpu.wait_dma2 semaphore(%135 : memref<!tpu.dma_semaphore, #tpu.memory_space<semaphore_mem>>) src(%arg4 : memref<128x256xbf16, #tpu.memory_space<any>>) dst(%arg9 : memref<128x256xbf16, #tpu.memory_space<vmem>>)
      %c1_i32_52 = arith.constant 1 : i32
      %136 = tpu.memref_slice %arg12[%c1_i32_52] : memref<3x!tpu.dma_semaphore, #tpu.memory_space<semaphore_mem>> -> memref<1x!tpu.dma_semaphore, #tpu.memory_space<semaphore_mem>>
      %137 = tpu.memref_squeeze %136 : memref<1x!tpu.dma_semaphore, #tpu.memory_space<semaphore_mem>> -> memref<!tpu.dma_semaphore, #tpu.memory_space<semaphore_mem>>
      tpu.wait_dma2 semaphore(%137 : memref<!tpu.dma_semaphore, #tpu.memory_space<semaphore_mem>>) src(%arg5 : memref<128x128xbf16, #tpu.memory_space<any>>) dst(%arg10 : memref<128x128xbf16, #tpu.memory_space<vmem>>)
      %c2_i32_53 = arith.constant 2 : i32
      %138 = tpu.memref_slice %arg12[%c2_i32_53] : memref<3x!tpu.dma_semaphore, #tpu.memory_space<semaphore_mem>> -> memref<1x!tpu.dma_semaphore, #tpu.memory_space<semaphore_mem>>
      %139 = tpu.memref_squeeze %138 : memref<1x!tpu.dma_semaphore, #tpu.memory_space<semaphore_mem>> -> memref<!tpu.dma_semaphore, #tpu.memory_space<semaphore_mem>>
      tpu.wait_dma2 semaphore(%139 : memref<!tpu.dma_semaphore, #tpu.memory_space<semaphore_mem>>) src(%arg6 : memref<128x128xbf16, #tpu.memory_space<any>>) dst(%arg11 : memref<128x128xbf16, #tpu.memory_space<vmem>>)
      %c0_54 = arith.constant 0 : index
      %c0_55 = arith.constant 0 : index
      %140 = vector.load %arg2[%c0_54, %c0_55] : memref<16x128xf32, #tpu.memory_space<vmem>>, vector<16x128xf32>
      %c0_56 = arith.constant 0 : index
      %c0_57 = arith.constant 0 : index
      %141 = vector.load %arg8[%c0_56, %c0_57] : memref<16x128xf32, #tpu.memory_space<vmem>>, vector<16x128xf32>
      tpu.vector_store %arg8[%c0_56, %c0_57], %140 {strides = array<i32>} : memref<16x128xf32, #tpu.memory_space<vmem>>, vector<16x128xf32>,
    } else {
    }
    %c0 = arith.constant 0 : index
    %c0_1 = arith.constant 0 : index
    %3 = vector.load %arg8[%c0, %c0_1] : memref<16x128xf32, #tpu.memory_space<vmem>>, vector<16x128xf32>
    %c0_2 = arith.constant 0 : index
    %c0_3 = arith.constant 0 : index
    %4 = vector.load %arg9[%c0_2, %c0_3] : memref<128x256xbf16, #tpu.memory_space<vmem>>, vector<128x256xbf16>
    %c0_4 = arith.constant 0 : index
    %c0_5 = arith.constant 0 : index
    %5 = vector.load %arg10[%c0_4, %c0_5] : memref<128x128xbf16, #tpu.memory_space<vmem>>, vector<128x128xbf16>
    %c0_6 = arith.constant 0 : index
    %c0_7 = arith.constant 0 : index
    %6 = vector.load %arg11[%c0_6, %c0_7] : memref<128x128xbf16, #tpu.memory_space<vmem>>, vector<128x128xbf16>
    %c0_8 = arith.constant 0 : index
    %c0_9 = arith.constant 0 : index
    %c0_10 = arith.constant 0 : index
    %7 = vector.load %arg3[%c0_8, %c0_9, %c0_10] : memref<4x16x384xbf16, #tpu.memory_space<vmem>>, vector<1x16x384xbf16>
    %8 = vector.shape_cast %7 : vector<1x16x384xbf16> to vector<16x384xbf16>
    %9 = arith.extf %8 : vector<16x384xbf16> to vector<16x384xf32>
    %10 = arith.truncf %3 : vector<16x128xf32> to vector<16x128xbf16>
    %cst = arith.constant dense<0.000000e+00> : vector<16x256xf32>
    %11 = tpu.matmul %10, %4, %cst {dimension_numbers = #tpu.dot_dimension_numbers<[1], [0], [0], [1], [0, 0, 1, 1], [], []>} : vector<16x128xbf16>, vector<128x256xbf16>, vector<16x256xf32> -> vector<16x256xf32>
    %12 = vector.extract_strided_slice %9 {offsets = [0, 0], sizes = [16, 256], strides = [1, 1]} : vector<16x384xf32> to vector<16x256xf32>
    %13 = arith.addf %12, %11 : vector<16x256xf32>
    %14 = arith.negf %13 : vector<16x256xf32>
    %15 = math.exp %14 : vector<16x256xf32>
    %cst_11 = arith.constant 1.000000e+00 : f32
    %16 = vector.broadcast %cst_11 : f32 to vector<16x256xf32>
    %17 = arith.addf %16, %15 : vector<16x256xf32>
    %18 = arith.divf %16, %17 : vector<16x256xf32>
    %19 = vector.extract_strided_slice %18 {offsets = [0, 0], sizes = [16, 128], strides = [1, 1]} : vector<16x256xf32> to vector<16x128xf32>
    %20 = vector.extract_strided_slice %18 {offsets = [0, 128], sizes = [16, 128], strides = [1, 1]} : vector<16x256xf32> to vector<16x128xf32>
    %21 = vector.extract_strided_slice %9 {offsets = [0, 256], sizes = [16, 128], strides = [1, 1]} : vector<16x384xf32> to vector<16x128xf32>
    %22 = arith.mulf %20, %3 : vector<16x128xf32>
    %23 = arith.truncf %22 : vector<16x128xf32> to vector<16x128xbf16>
    %cst_12 = arith.constant dense<0.000000e+00> : vector<16x128xf32>
    %24 = tpu.matmul %23, %5, %cst_12 {dimension_numbers = #tpu.dot_dimension_numbers<[1], [0], [0], [1], [0, 0, 1, 1], [], []>} : vector<16x128xbf16>, vector<128x128xbf16>, vector<16x128xf32> -> vector<16x128xf32>
    %25 = arith.addf %21, %24 : vector<16x128xf32>
    %26 = math.tanh %25 : vector<16x128xf32>
    %27 = arith.truncf %26 : vector<16x128xf32> to vector<16x128xbf16>
    %cst_13 = arith.constant dense<0.000000e+00> : vector<16x128xf32>
    %28 = tpu.matmul %27, %6, %cst_13 {dimension_numbers = #tpu.dot_dimension_numbers<[1], [0], [0], [1], [0, 0, 1, 1], [], []>} : vector<16x128xbf16>, vector<128x128xbf16>, vector<16x128xf32> -> vector<16x128xf32>
    %29 = arith.mulf %19, %3 : vector<16x128xf32>
    %cst_14 = arith.constant 1.000000e+00 : f32
    %30 = vector.broadcast %cst_14 : f32 to vector<16x128xf32>
    %31 = arith.subf %30, %19 : vector<16x128xf32>
    %32 = arith.mulf %31, %28 : vector<16x128xf32>
    %33 = arith.addf %29, %32 : vector<16x128xf32>
    %c0_15 = arith.constant 0 : index
    %c0_16 = arith.constant 0 : index
    %c0_17 = arith.constant 0 : index
    %34 = vector.load %arg7[%c0_15, %c0_16, %c0_17] : memref<4x16x128xf32, #tpu.memory_space<vmem>>, vector<1x16x128xf32>
    %35 = vector.shape_cast %34 : vector<1x16x128xf32> to vector<16x128xf32>
    %36 = vector.shape_cast %33 : vector<16x128xf32> to vector<1x16x128xf32>
    tpu.vector_store %arg7[%c0_15, %c0_16, %c0_17], %36 {strides = array<i32>} : memref<4x16x128xf32, #tpu.memory_space<vmem>>, vector<1x16x128xf32>,
    %c1 = arith.constant 1 : index
    %c0_18 = arith.constant 0 : index
    %c0_19 = arith.constant 0 : index
    %37 = vector.load %arg3[%c1, %c0_18, %c0_19] : memref<4x16x384xbf16, #tpu.memory_space<vmem>>, vector<1x16x384xbf16>
    %38 = vector.shape_cast %37 : vector<1x16x384xbf16> to vector<16x384xbf16>
    %39 = arith.extf %38 : vector<16x384xbf16> to vector<16x384xf32>
    %40 = arith.truncf %33 : vector<16x128xf32> to vector<16x128xbf16>
    %cst_20 = arith.constant dense<0.000000e+00> : vector<16x256xf32>
    %41 = tpu.matmul %40, %4, %cst_20 {dimension_numbers = #tpu.dot_dimension_numbers<[1], [0], [0], [1], [0, 0, 1, 1], [], []>} : vector<16x128xbf16>, vector<128x256xbf16>, vector<16x256xf32> -> vector<16x256xf32>
    %42 = vector.extract_strided_slice %39 {offsets = [0, 0], sizes = [16, 256], strides = [1, 1]} : vector<16x384xf32> to vector<16x256xf32>
    %43 = arith.addf %42, %41 : vector<16x256xf32>
    %44 = arith.negf %43 : vector<16x256xf32>
    %45 = math.exp %44 : vector<16x256xf32>
    %cst_21 = arith.constant 1.000000e+00 : f32
    %46 = vector.broadcast %cst_21 : f32 to vector<16x256xf32>
    %47 = arith.addf %46, %45 : vector<16x256xf32>
    %48 = arith.divf %46, %47 : vector<16x256xf32>
    %49 = vector.extract_strided_slice %48 {offsets = [0, 0], sizes = [16, 128], strides = [1, 1]} : vector<16x256xf32> to vector<16x128xf32>
    %50 = vector.extract_strided_slice %48 {offsets = [0, 128], sizes = [16, 128], strides = [1, 1]} : vector<16x256xf32> to vector<16x128xf32>
    %51 = vector.extract_strided_slice %39 {offsets = [0, 256], sizes = [16, 128], strides = [1, 1]} : vector<16x384xf32> to vector<16x128xf32>
    %52 = arith.mulf %50, %33 : vector<16x128xf32>
    %53 = arith.truncf %52 : vector<16x128xf32> to vector<16x128xbf16>
    %cst_22 = arith.constant dense<0.000000e+00> : vector<16x128xf32>
    %54 = tpu.matmul %53, %5, %cst_22 {dimension_numbers = #tpu.dot_dimension_numbers<[1], [0], [0], [1], [0, 0, 1, 1], [], []>} : vector<16x128xbf16>, vector<128x128xbf16>, vector<16x128xf32> -> vector<16x128xf32>
    %55 = arith.addf %51, %54 : vector<16x128xf32>
    %56 = math.tanh %55 : vector<16x128xf32>
    %57 = arith.truncf %56 : vector<16x128xf32> to vector<16x128xbf16>
    %cst_23 = arith.constant dense<0.000000e+00> : vector<16x128xf32>
    %58 = tpu.matmul %57, %6, %cst_23 {dimension_numbers = #tpu.dot_dimension_numbers<[1], [0], [0], [1], [0, 0, 1, 1], [], []>} : vector<16x128xbf16>, vector<128x128xbf16>, vector<16x128xf32> -> vector<16x128xf32>
    %59 = arith.mulf %49, %33 : vector<16x128xf32>
    %cst_24 = arith.constant 1.000000e+00 : f32
    %60 = vector.broadcast %cst_24 : f32 to vector<16x128xf32>
    %61 = arith.subf %60, %49 : vector<16x128xf32>
    %62 = arith.mulf %61, %58 : vector<16x128xf32>
    %63 = arith.addf %59, %62 : vector<16x128xf32>
    %c1_25 = arith.constant 1 : index
    %c0_26 = arith.constant 0 : index
    %c0_27 = arith.constant 0 : index
    %64 = vector.load %arg7[%c1_25, %c0_26, %c0_27] : memref<4x16x128xf32, #tpu.memory_space<vmem>>, vector<1x16x128xf32>
    %65 = vector.shape_cast %64 : vector<1x16x128xf32> to vector<16x128xf32>
    %66 = vector.shape_cast %63 : vector<16x128xf32> to vector<1x16x128xf32>
    tpu.vector_store %arg7[%c1_25, %c0_26, %c0_27], %66 {strides = array<i32>} : memref<4x16x128xf32, #tpu.memory_space<vmem>>, vector<1x16x128xf32>,
    %c2 = arith.constant 2 : index
    %c0_28 = arith.constant 0 : index
    %c0_29 = arith.constant 0 : index
    %67 = vector.load %arg3[%c2, %c0_28, %c0_29] : memref<4x16x384xbf16, #tpu.memory_space<vmem>>, vector<1x16x384xbf16>
    %68 = vector.shape_cast %67 : vector<1x16x384xbf16> to vector<16x384xbf16>
    %69 = arith.extf %68 : vector<16x384xbf16> to vector<16x384xf32>
    %70 = arith.truncf %63 : vector<16x128xf32> to vector<16x128xbf16>
    %cst_30 = arith.constant dense<0.000000e+00> : vector<16x256xf32>
    %71 = tpu.matmul %70, %4, %cst_30 {dimension_numbers = #tpu.dot_dimension_numbers<[1], [0], [0], [1], [0, 0, 1, 1], [], []>} : vector<16x128xbf16>, vector<128x256xbf16>, vector<16x256xf32> -> vector<16x256xf32>
    %72 = vector.extract_strided_slice %69 {offsets = [0, 0], sizes = [16, 256], strides = [1, 1]} : vector<16x384xf32> to vector<16x256xf32>
    %73 = arith.addf %72, %71 : vector<16x256xf32>
    %74 = arith.negf %73 : vector<16x256xf32>
    %75 = math.exp %74 : vector<16x256xf32>
    %cst_31 = arith.constant 1.000000e+00 : f32
    %76 = vector.broadcast %cst_31 : f32 to vector<16x256xf32>
    %77 = arith.addf %76, %75 : vector<16x256xf32>
    %78 = arith.divf %76, %77 : vector<16x256xf32>
    %79 = vector.extract_strided_slice %78 {offsets = [0, 0], sizes = [16, 128], strides = [1, 1]} : vector<16x256xf32> to vector<16x128xf32>
    %80 = vector.extract_strided_slice %78 {offsets = [0, 128], sizes = [16, 128], strides = [1, 1]} : vector<16x256xf32> to vector<16x128xf32>
    %81 = vector.extract_strided_slice %69 {offsets = [0, 256], sizes = [16, 128], strides = [1, 1]} : vector<16x384xf32> to vector<16x128xf32>
    %82 = arith.mulf %80, %63 : vector<16x128xf32>
    %83 = arith.truncf %82 : vector<16x128xf32> to vector<16x128xbf16>
    %cst_32 = arith.constant dense<0.000000e+00> : vector<16x128xf32>
    %84 = tpu.matmul %83, %5, %cst_32 {dimension_numbers = #tpu.dot_dimension_numbers<[1], [0], [0], [1], [0, 0, 1, 1], [], []>} : vector<16x128xbf16>, vector<128x128xbf16>, vector<16x128xf32> -> vector<16x128xf32>
    %85 = arith.addf %81, %84 : vector<16x128xf32>
    %86 = math.tanh %85 : vector<16x128xf32>
    %87 = arith.truncf %86 : vector<16x128xf32> to vector<16x128xbf16>
    %cst_33 = arith.constant dense<0.000000e+00> : vector<16x128xf32>
    %88 = tpu.matmul %87, %6, %cst_33 {dimension_numbers = #tpu.dot_dimension_numbers<[1], [0], [0], [1], [0, 0, 1, 1], [], []>} : vector<16x128xbf16>, vector<128x128xbf16>, vector<16x128xf32> -> vector<16x128xf32>
    %89 = arith.mulf %79, %63 : vector<16x128xf32>
    %cst_34 = arith.constant 1.000000e+00 : f32
    %90 = vector.broadcast %cst_34 : f32 to vector<16x128xf32>
    %91 = arith.subf %90, %79 : vector<16x128xf32>
    %92 = arith.mulf %91, %88 : vector<16x128xf32>
    %93 = arith.addf %89, %92 : vector<16x128xf32>
    %c2_35 = arith.constant 2 : index
    %c0_36 = arith.constant 0 : index
    %c0_37 = arith.constant 0 : index
    %94 = vector.load %arg7[%c2_35, %c0_36, %c0_37] : memref<4x16x128xf32, #tpu.memory_space<vmem>>, vector<1x16x128xf32>
    %95 = vector.shape_cast %94 : vector<1x16x128xf32> to vector<16x128xf32>
    %96 = vector.shape_cast %93 : vector<16x128xf32> to vector<1x16x128xf32>
    tpu.vector_store %arg7[%c2_35, %c0_36, %c0_37], %96 {strides = array<i32>} : memref<4x16x128xf32, #tpu.memory_space<vmem>>, vector<1x16x128xf32>,
    %c3 = arith.constant 3 : index
    %c0_38 = arith.constant 0 : index
    %c0_39 = arith.constant 0 : index
    %97 = vector.load %arg3[%c3, %c0_38, %c0_39] : memref<4x16x384xbf16, #tpu.memory_space<vmem>>, vector<1x16x384xbf16>
    %98 = vector.shape_cast %97 : vector<1x16x384xbf16> to vector<16x384xbf16>
    %99 = arith.extf %98 : vector<16x384xbf16> to vector<16x384xf32>
    %100 = arith.truncf %93 : vector<16x128xf32> to vector<16x128xbf16>
    %cst_40 = arith.constant dense<0.000000e+00> : vector<16x256xf32>
    %101 = tpu.matmul %100, %4, %cst_40 {dimension_numbers = #tpu.dot_dimension_numbers<[1], [0], [0], [1], [0, 0, 1, 1], [], []>} : vector<16x128xbf16>, vector<128x256xbf16>, vector<16x256xf32> -> vector<16x256xf32>
    %102 = vector.extract_strided_slice %99 {offsets = [0, 0], sizes = [16, 256], strides = [1, 1]} : vector<16x384xf32> to vector<16x256xf32>
    %103 = arith.addf %102, %101 : vector<16x256xf32>
    %104 = arith.negf %103 : vector<16x256xf32>
    %105 = math.exp %104 : vector<16x256xf32>
    %cst_41 = arith.constant 1.000000e+00 : f32
    %106 = vector.broadcast %cst_41 : f32 to vector<16x256xf32>
    %107 = arith.addf %106, %105 : vector<16x256xf32>
    %108 = arith.divf %106, %107 : vector<16x256xf32>
    %109 = vector.extract_strided_slice %108 {offsets = [0, 0], sizes = [16, 128], strides = [1, 1]} : vector<16x256xf32> to vector<16x128xf32>
    %110 = vector.extract_strided_slice %108 {offsets = [0, 128], sizes = [16, 128], strides = [1, 1]} : vector<16x256xf32> to vector<16x128xf32>
    %111 = vector.extract_strided_slice %99 {offsets = [0, 256], sizes = [16, 128], strides = [1, 1]} : vector<16x384xf32> to vector<16x128xf32>
    %112 = arith.mulf %110, %93 : vector<16x128xf32>
    %113 = arith.truncf %112 : vector<16x128xf32> to vector<16x128xbf16>
    %cst_42 = arith.constant dense<0.000000e+00> : vector<16x128xf32>
    %114 = tpu.matmul %113, %5, %cst_42 {dimension_numbers = #tpu.dot_dimension_numbers<[1], [0], [0], [1], [0, 0, 1, 1], [], []>} : vector<16x128xbf16>, vector<128x128xbf16>, vector<16x128xf32> -> vector<16x128xf32>
    %115 = arith.addf %111, %114 : vector<16x128xf32>
    %116 = math.tanh %115 : vector<16x128xf32>
    %117 = arith.truncf %116 : vector<16x128xf32> to vector<16x128xbf16>
    %cst_43 = arith.constant dense<0.000000e+00> : vector<16x128xf32>
    %118 = tpu.matmul %117, %6, %cst_43 {dimension_numbers = #tpu.dot_dimension_numbers<[1], [0], [0], [1], [0, 0, 1, 1], [], []>} : vector<16x128xbf16>, vector<128x128xbf16>, vector<16x128xf32> -> vector<16x128xf32>
    %119 = arith.mulf %109, %93 : vector<16x128xf32>
    %cst_44 = arith.constant 1.000000e+00 : f32
    %120 = vector.broadcast %cst_44 : f32 to vector<16x128xf32>
    %121 = arith.subf %120, %109 : vector<16x128xf32>
    %122 = arith.mulf %121, %118 : vector<16x128xf32>
    %123 = arith.addf %119, %122 : vector<16x128xf32>
    %c3_45 = arith.constant 3 : index
    %c0_46 = arith.constant 0 : index
    %c0_47 = arith.constant 0 : index
    %124 = vector.load %arg7[%c3_45, %c0_46, %c0_47] : memref<4x16x128xf32, #tpu.memory_space<vmem>>, vector<1x16x128xf32>
    %125 = vector.shape_cast %124 : vector<1x16x128xf32> to vector<16x128xf32>
    %126 = vector.shape_cast %123 : vector<16x128xf32> to vector<1x16x128xf32>
    tpu.vector_store %arg7[%c3_45, %c0_46, %c0_47], %126 {strides = array<i32>} : memref<4x16x128xf32, #tpu.memory_space<vmem>>, vector<1x16x128xf32>,
    %c0_48 = arith.constant 0 : index
    %c0_49 = arith.constant 0 : index
    %127 = vector.load %arg8[%c0_48, %c0_49] : memref<16x128xf32, #tpu.memory_space<vmem>>, vector<16x128xf32>
    tpu.vector_store %arg8[%c0_48, %c0_49], %123 {strides = array<i32>} : memref<16x128xf32, #tpu.memory_space<vmem>>, vector<16x128xf32>,
    return
  }
  func.func @transform_0(%arg0: i32, %arg1: i32) -> (i32, i32) {
    %c0_i32 = arith.constant 0 : i32
    %c0_i32_0 = arith.constant 0 : i32
    return %arg0, %c0_i32 : i32, i32
  }
  func.func @transform_1(%arg0: i32, %arg1: i32) -> (i32, i32, i32) {
    %c0_i32 = arith.constant 0 : i32
    %c0_i32_0 = arith.constant 0 : i32
    return %arg1, %arg0, %c0_i32 : i32, i32, i32
  }
  func.func @transform_5(%arg0: i32, %arg1: i32) -> (i32, i32, i32) {
    %c0_i32 = arith.constant 0 : i32
    %c0_i32_0 = arith.constant 0 : i32
    return %arg1, %arg0, %c0_i32 : i32, i32, i32
  }
}

</mosaic_0001>

<llo_original>
// kernel: igru_sequence.2
$region0: #{igru_sequence.2}
  #allocation0 [shape = 'u32[]', space=smem, size = 0x4, offset = 0x4, fixed_abs, tag = 'smem constant byte address 0x4 - core index']
  #allocation1 [shape = 'u32[144,128]{1,0:T(1,128)}', space=vmem, size = 0x12000, scoped, tag = 'internal scratch']
  %s0 = inlined_call_operand.vmem [shape: bf16[128,128], index: 0, kind: input, shape index: {}]
  %s1 = inlined_call_operand.vmem [shape: bf16[128,384], index: 1, kind: input, shape index: {}]
  %s2 = inlined_call_operand.vmem [shape: f32[1,384], index: 2, kind: input, shape index: {}]
  %s3 = inlined_call_operand.vmem [shape: bf16[128,384], index: 3, kind: output, shape index: {}]
  %s4 = sld [smem:[#allocation0]]
  $region45: #{igru_sequence.2} parent=0
    _
  %s6 = ssub.s32 1, %s4
  %s7 = scalar_select 0, %s6, %s4
  loop: start=0, step=1, limit=4
  $region2: #{igru_sequence.2} parent=0 // loop_pre_header
    _
  $region3: #{igru_sequence.2} parent=0 // loop_header
    %s9 = sphi 0, %s13
    %p10 = scmp.ge.s32.totalorder %s9, 4
    %s19 = sphi 0, %s21
    %s22 = sphi 0, %s19
    %s23 = sphi 0, %s22
    %s39 = sphi 0, %s23
    %s43 = sphi 0, %s43
    %s45 = sphi 0, %s43
    %s46 = sphi 0, %s45
    %s60 = sphi 0, %s46
    %s64 = sphi 0, %s64
    %s66 = sphi 0, %s64
    %s67 = sphi 0, %s66
    %s81 = sphi 0, %s67
    %s87 = sphi 0, %s89
    %s90 = sphi 0, %s87
    %s91 = sphi 0, %s90
    %s107 = sphi 0, %s91
  $region4: #{igru_sequence.2} parent=0 // loop_header_branch
    %12 = sbr.rel (%p10) target = $region8
  $region5: #{igru_sequence.2} parent=0 // loop_body
    %s14 = ssub.s32 %s9, 1
    %s15 = ssub.s32 %s9, 2
    %s16 = sadd.s32 %s9, 1
    %s17 = ssub.s32 %s9, %s16
    %p18 = scmp.eq.s32.totalorder %s17, 0
    %s20 = sadd.s32 %s19, 1
    %s21 = scalar_select %p18, %s19, %s20
    %p24 = pneg %p18
    %p25 = scmp.eq.s32.totalorder %s9, 1
    %p26 = por %p24, %p25
    %p27 = scmp.ne.s32.totalorder %s19, %s22
    %p28 = scmp.eq.s32.totalorder %s9, 0
    %p29 = por %p27, %p28
    %p30 = scmp.ne.s32.totalorder %s19, %s22
    %p31 = scmp.eq.s32.totalorder %s14, 1
    %p32 = por %p30, %p31
    %p33 = scmp.ne.s32.totalorder %s22, %s23
    %p34 = scmp.eq.s32.totalorder %s14, 0
    %p35 = por %p33, %p34
    %p36 = scmp.ne.s32.totalorder %s22, %s23
    %p37 = scmp.eq.s32.totalorder %s15, 1
    %p38 = por %p36, %p37
    %p40 = scmp.ne.s32.totalorder %s23, %s39
    %p41 = scmp.eq.s32.totalorder %s15, 0
    %p42 = por %p40, %p41
    %s44 = sadd.s32 %s43, 1
    %p47 = scmp.eq.s32.totalorder %s9, 1
    %p48 = scmp.ne.s32.totalorder %s43, %s45
    %p49 = scmp.eq.s32.totalorder %s9, 0
    %p50 = por %p48, %p49
    %p51 = scmp.ne.s32.totalorder %s43, %s45
    %p52 = scmp.eq.s32.totalorder %s14, 1
    %p53 = por %p51, %p52
    %p54 = scmp.ne.s32.totalorder %s45, %s46
    %p55 = scmp.eq.s32.totalorder %s14, 0
    %p56 = por %p54, %p55
    %p57 = scmp.ne.s32.totalorder %s45, %s46
    %p58 = scmp.eq.s32.totalorder %s15, 1
    %p59 = por %p57, %p58
    %p61 = scmp.ne.s32.totalorder %s46, %s60
    %p62 = scmp.eq.s32.totalorder %s15, 0
    %p63 = por %p61, %p62
    %s65 = sadd.s32 %s64, 1
    %p68 = scmp.eq.s32.totalorder %s9, 1
    %p69 = scmp.ne.s32.totalorder %s64, %s66
    %p70 = scmp.eq.s32.totalorder %s9, 0
    %p71 = por %p69, %p70
    %p72 = scmp.ne.s32.totalorder %s64, %s66
    %p73 = scmp.eq.s32.totalorder %s14, 1
    %p74 = por %p72, %p73
    %p75 = scmp.ne.s32.totalorder %s66, %s67
    %p76 = scmp.eq.s32.totalorder %s14, 0
    %p77 = por %p75, %p76
    %p78 = scmp.ne.s32.totalorder %s66, %s67
    %p79 = scmp.eq.s32.totalorder %s15, 1
    %p80 = por %p78, %p79
    %p82 = scmp.ne.s32.totalorder %s67, %s81
    %p83 = scmp.eq.s32.totalorder %s15, 0
    %p84 = por %p82, %p83
    %s85 = ssub.s32 %s9, %s16
    %p86 = scmp.eq.s32.totalorder %s85, 0
    %s88 = sadd.s32 %s87, 1
    %s89 = scalar_select %p86, %s87, %s88
    %p92 = pneg %p86
    %p93 = scmp.eq.s32.totalorder %s9, 1
    %p94 = por %p92, %p93
    %p95 = scmp.ne.s32.totalorder %s87, %s90
    %p96 = scmp.eq.s32.totalorder %s9, 0
    %p97 = por %p95, %p96
    %p98 = scmp.ne.s32.totalorder %s87, %s90
    %p99 = scmp.eq.s32.totalorder %s14, 1
    %p100 = por %p98, %p99
    %p101 = scmp.ne.s32.totalorder %s90, %s91
    %p102 = scmp.eq.s32.totalorder %s14, 0
    %p103 = por %p101, %p102
    %p104 = scmp.ne.s32.totalorder %s90, %s91
    %p105 = scmp.eq.s32.totalorder %s15, 1
    %p106 = por %p104, %p105
    %p108 = scmp.ne.s32.totalorder %s91, %s107
    %p109 = scmp.eq.s32.totalorder %s15, 0
    %p110 = por %p108, %p109
    %p111 = scmp.le.s32.totalorder 1, %s9
    %p112 = scmp.lt.s32.totalorder %s9, 3
    %p113 = pnand %p111, %p112
    %p114 = pneg %p113
    // Predicated region
    $region9: #{igru_sequence.2} parent=5 // pred_check
      _
    $region10: #{igru_sequence.2} parent=5 // pred_check_branch
      %116 = sbr.rel (%p113) target = $region12
    $region11: #{igru_sequence.2} parent=5 // pred_region
      %s117 = ssub.s32 %s9, 1
      // Predicated region
      $region13: #{igru_sequence.2} parent=11 // pred_check
        %p118 = pneg %p56
      $region14: #{igru_sequence.2} parent=11 // pred_check_branch
        %120 = sbr.rel (%p118) target = $region16
      $region15: #{igru_sequence.2} parent=11 // pred_region
        _
      $region16: #{igru_sequence.2} parent=11 // pred_fallthru
        _
      // Predicated region
      $region17: #{igru_sequence.2} parent=11 // pred_check
        %p121 = pneg %p77
      $region18: #{igru_sequence.2} parent=11 // pred_check_branch
        %123 = sbr.rel (%p121) target = $region20
      $region19: #{igru_sequence.2} parent=11 // pred_region
        _
      $region20: #{igru_sequence.2} parent=11 // pred_fallthru
        _
    $region12: #{igru_sequence.2} parent=5 // pred_fallthru
      _
    %p124 = scmp.lt.s32.totalorder %s9, 2
    // Predicated region
    $region21: #{igru_sequence.2} parent=5 // pred_check
      %p125 = pneg %p124
    $region22: #{igru_sequence.2} parent=5 // pred_check_branch
      %127 = sbr.rel (%p125) target = $region24
    $region23: #{igru_sequence.2} parent=5 // pred_region
      // Predicated region
      $region25: #{igru_sequence.2} parent=23 // pred_check
        %p128 = pneg %p29
      $region26: #{igru_sequence.2} parent=23 // pred_check_branch
        %130 = sbr.rel (%p128) target = $region28
      $region27: #{igru_sequence.2} parent=23 // pred_region
        %s131 = smul.u32 8, %s9
        %p132 = scmp.lt.s32.totalorder %s131, 15
        %s133 = scalar_select %p132, %s131, 15
        %s134 = smul.addr %s133, 4
        %s135 = scalar_lea.vmem %s0, %s134
        %s136 = smul.u32 8, %s9
      $region28: #{igru_sequence.2} parent=23 // pred_fallthru
        _
    $region24: #{igru_sequence.2} parent=5 // pred_fallthru
      _
    %p137 = scmp.le.s32.totalorder 1, %s9
    %p138 = scmp.lt.s32.totalorder %s9, 3
    %p139 = pnand %p137, %p138
    %p140 = pneg %p139
    // Predicated region
    $region29: #{igru_sequence.2} parent=5 // pred_check
      _
    $region30: #{igru_sequence.2} parent=5 // pred_check_branch
      %142 = sbr.rel (%p139) target = $region32
    $region31: #{igru_sequence.2} parent=5 // pred_region
      %s143 = ssub.s32 %s9, 1
      %s144 = smul.u32 8, %s14
      %p145 = scmp.lt.s32.totalorder %s144, 15
      %s146 = scalar_select %p145, %s144, 15
      %s147 = smul.addr %s146, 4
      %s148 = scalar_lea.vmem %s0, %s147
      %p149 = pneg %p35
      %p150 = pneg %p32
      %p151 = pneg %p56
      %p152 = pneg %p53
      %p153 = pneg %p77
      %p154 = pneg %p74
      %p155 = pneg %p103
      %p156 = pneg %p100
      %s157 = smul.u32 8, %s14
      %p158 = scmp.lt.s32.totalorder %s157, 15
      %s159 = scalar_select %p158, %s157, 15
      %s160 = smul.addr %s159, 3
      %s161 = smul.addr %s160, 4
      %s162 = scalar_lea.vmem %s3, %s161
      %s163 = smul.u32 8, %s14
      %p164 = scmp.lt.s32.totalorder %s163, 15
      %s165 = scalar_select %p164, %s163, 15
      %s166 = smul.addr %s165, 4
      %s167 = scalar_lea.vmem %s0, %s166
      %s168 = smul.u32 8, %s14
      %s169 = smul.u32 8, %s14
      %p170 = scmp.lt.s32.totalorder %s169, 15
      %s171 = scalar_select %p170, %s169, 15
      %s172 = smul.addr %s171, 3
      %s173 = smul.addr %s172, 4
      %s174 = scalar_lea.vmem %s3, %s173
      %s175 = smul.u32 8, %s14
      %v177 = vld [vmem:[%s167] sm:$0xf]
      %v178 = vld [vmem:[%s167 + $0x4] sm:$0xf]
      %v179 = vld [vmem:[%s167 + $0x8] sm:$0xf]
      %v180 = vld [vmem:[%s167 + $0xc] sm:$0xf]
      %v181 = vld [vmem:[%s167 + $0x10] sm:$0xf]
      %v182 = vld [vmem:[%s167 + $0x14] sm:$0xf]
      %v183 = vld [vmem:[%s167 + $0x18] sm:$0xf]
      %v184 = vld [vmem:[%s167 + $0x1c] sm:$0xf]
      %v185 = vld [vmem:[%s1] sm:$0xff]
      %v186 = vld [vmem:[%s1 + $0x8] sm:$0xf]
      %v187 = vld [vmem:[%s1 + $0xc] sm:$0xff]
      %v188 = vld [vmem:[%s1 + $0x14] sm:$0xf]
      %v189 = vld [vmem:[%s1 + $0x18] sm:$0xff]
      %v190 = vld [vmem:[%s1 + $0x20] sm:$0xf]
      %v191 = vld [vmem:[%s1 + $0x24] sm:$0xff]
      %v192 = vld [vmem:[%s1 + $0x2c] sm:$0xf]
      %v193 = vld [vmem:[%s1 + $0x30] sm:$0xff]
      %v194 = vld [vmem:[%s1 + $0x38] sm:$0xf]
      %v195 = vld [vmem:[%s1 + $0x3c] sm:$0xff]
      %v196 = vld [vmem:[%s1 + $0x44] sm:$0xf]
      %v197 = vld [vmem:[%s1 + $0x48] sm:$0xff]
      %v198 = vld [vmem:[%s1 + $0x50] sm:$0xf]
      %v199 = vld [vmem:[%s1 + $0x54] sm:$0xff]
      %v200 = vld [vmem:[%s1 + $0x5c] sm:$0xf]
      %v201 = vld [vmem:[%s1 + $0x60] sm:$0xff]
      %v202 = vld [vmem:[%s1 + $0x68] sm:$0xf]
      %v203 = vld [vmem:[%s1 + $0x6c] sm:$0xff]
      %v204 = vld [vmem:[%s1 + $0x74] sm:$0xf]
      %v205 = vld [vmem:[%s1 + $0x78] sm:$0xff]
      %v206 = vld [vmem:[%s1 + $0x80] sm:$0xf]
      %v207 = vld [vmem:[%s1 + $0x84] sm:$0xff]
      %v208 = vld [vmem:[%s1 + $0x8c] sm:$0xf]
      %v209 = vld [vmem:[%s1 + $0x90] sm:$0xff]
      %v210 = vld [vmem:[%s1 + $0x98] sm:$0xf]
      %v211 = vld [vmem:[%s1 + $0x9c] sm:$0xff]
      %v212 = vld [vmem:[%s1 + $0xa4] sm:$0xf]
      %v213 = vld [vmem:[%s1 + $0xa8] sm:$0xff]
      %v214 = vld [vmem:[%s1 + $0xb0] sm:$0xf]
      %v215 = vld [vmem:[%s1 + $0xb4] sm:$0xff]
      %v216 = vld [vmem:[%s1 + $0xbc] sm:$0xf]
      %v217 = vld [vmem:[%s2] sm:$0x7]
      %v219 = vlaneseq
      %v220 = vshrl.u32 %v219, 7
      %v221 = vsub.s32 0, %v220
      %v222 = vrot.slane %v217, %v221
      %v223 = vlaneseq
      %v224 = vshrl.u32 %v223, 7
      %v225 = vsub.s32 1, %v224
      %v226 = vrot.slane %v217, %v225
      %v227 = vlaneseq
      %v228 = vshrl.u32 %v227, 7
      %v229 = vsub.s32 2, %v228
      %v230 = vrot.slane %v217, %v229
      %v242 = vunpack.c.l.b16 %v177
      %v243 = vunpack.c.l.b16 %v178
      %v244 = vunpack.c.l.b16 %v179
      %v245 = vunpack.c.l.b16 %v180
      %v246 = vunpack.c.l.b16 %v181
      %v247 = vunpack.c.l.b16 %v182
      %v248 = vunpack.c.l.b16 %v183
      %v249 = vunpack.c.l.b16 %v184
      %v250 = vpack.c.b16 %v243, %v242
      %v251 = vpack.c.b16 %v245, %v244
      %v252 = vpack.c.b16 %v247, %v246
      %v253 = vpack.c.b16 %v249, %v248
      %v290 = vunpack.c.l.b16 %v185
      %v291 = vunpack.c.h.b16 %v185
      %v292 = vunpack.c.l.b16 %v186
      %v293 = vunpack.c.l.b16 %v187
      %v294 = vunpack.c.h.b16 %v187
      %v295 = vunpack.c.l.b16 %v188
      %v296 = vunpack.c.l.b16 %v189
      %v297 = vunpack.c.h.b16 %v189
      %v298 = vunpack.c.l.b16 %v190
      %v299 = vunpack.c.l.b16 %v191
      %v300 = vunpack.c.h.b16 %v191
      %v301 = vunpack.c.l.b16 %v192
      %v302 = vunpack.c.l.b16 %v193
      %v303 = vunpack.c.h.b16 %v193
      %v304 = vunpack.c.l.b16 %v194
      %v305 = vunpack.c.l.b16 %v195
      %v306 = vunpack.c.h.b16 %v195
      %v307 = vunpack.c.l.b16 %v196
      %v308 = vunpack.c.l.b16 %v197
      %v309 = vunpack.c.h.b16 %v197
      %v310 = vunpack.c.l.b16 %v198
      %v311 = vunpack.c.l.b16 %v199
      %v312 = vunpack.c.h.b16 %v199
      %v313 = vunpack.c.l.b16 %v200
      %v314 = vunpack.c.l.b16 %v201
      %v315 = vunpack.c.h.b16 %v201
      %v316 = vunpack.c.l.b16 %v202
      %v317 = vunpack.c.l.b16 %v203
      %v318 = vunpack.c.h.b16 %v203
      %v319 = vunpack.c.l.b16 %v204
      %v320 = vunpack.c.l.b16 %v205
      %v321 = vunpack.c.h.b16 %v205
      %v322 = vunpack.c.l.b16 %v206
      %v323 = vunpack.c.l.b16 %v207
      %v324 = vunpack.c.h.b16 %v207
      %v325 = vunpack.c.l.b16 %v208
      %v326 = vunpack.c.l.b16 %v209
      %v327 = vunpack.c.h.b16 %v209
      %v328 = vunpack.c.l.b16 %v210
      %v329 = vunpack.c.l.b16 %v211
      %v330 = vunpack.c.h.b16 %v211
      %v331 = vunpack.c.l.b16 %v212
      %v332 = vunpack.c.l.b16 %v213
      %v333 = vunpack.c.h.b16 %v213
      %v334 = vunpack.c.l.b16 %v214
      %v335 = vunpack.c.l.b16 %v215
      %v336 = vunpack.c.h.b16 %v215
      %v337 = vunpack.c.l.b16 %v216
      %v338 = vpack.c.b16 %v293, %v290
      %v339 = vpack.c.b16 %v294, %v291
      %v340 = vpack.c.b16 %v295, %v292
      %v341 = vpack.c.b16 %v299, %v296
      %v342 = vpack.c.b16 %v300, %v297
      %v343 = vpack.c.b16 %v301, %v298
      %v344 = vpack.c.b16 %v305, %v302
      %v345 = vpack.c.b16 %v306, %v303
      %v346 = vpack.c.b16 %v307, %v304
      %v347 = vpack.c.b16 %v311, %v308
      %v348 = vpack.c.b16 %v312, %v309
      %v349 = vpack.c.b16 %v313, %v310
      %v350 = vpack.c.b16 %v317, %v314
      %v351 = vpack.c.b16 %v318, %v315
      %v352 = vpack.c.b16 %v319, %v316
      %v353 = vpack.c.b16 %v323, %v320
      %v354 = vpack.c.b16 %v324, %v321
      %v355 = vpack.c.b16 %v325, %v322
      %v356 = vpack.c.b16 %v329, %v326
      %v357 = vpack.c.b16 %v330, %v327
      %v358 = vpack.c.b16 %v331, %v328
      %v359 = vpack.c.b16 %v335, %v332
      %v360 = vpack.c.b16 %v336, %v333
      %v361 = vpack.c.b16 %v337, %v334
      %386 = vmatprep.subr.bf16.mxu0 %v339
      %387 = vmatpush1.bf16.msra.mxu0 %v338
      %388 = vmatprep.subr.bf16.mxu0 %v342
      %389 = vmatpush1.bf16.msra.mxu0 %v341
      %390 = vmatprep.subr.bf16.mxu0 %v345
      %391 = vmatpush1.bf16.msra.mxu0 %v344
      %392 = vmatprep.subr.bf16.mxu0 %v348
      %393 = vmatpush1.bf16.msra.mxu0 %v347
      %394 = vmatprep.subr.bf16.mxu0 %v351
      %395 = vmatpush1.bf16.msra.mxu0 %v350
      %396 = vmatprep.subr.bf16.mxu0 %v354
      %397 = vmatpush1.bf16.msra.mxu0 %v353
      %398 = vmatprep.subr.bf16.mxu0 %v357
      %399 = vmatpush1.bf16.msra.mxu0 %v356
      %400 = vmatprep.subr.bf16.mxu0 %v360
      %401 = vmatpush1.bf16.msra.mxu0 %v359
      %402 = vmatprep.subr.bf16.mxu0 0
      %403 = vmatpush1.bf16.msra.mxu0 0
      %404 = vmatprep.subr.bf16.mxu0 0
      %405 = vmatpush1.bf16.msra.mxu0 0
      %406 = vmatprep.subr.bf16.mxu0 0
      %407 = vmatpush1.bf16.msra.mxu0 0
      %408 = vmatprep.subr.bf16.mxu0 0
      %409 = vmatpush1.bf16.msra.mxu0 0
      %410 = vmatprep.subr.bf16.mxu0 0
      %411 = vmatpush1.bf16.msra.mxu0 0
      %412 = vmatprep.subr.bf16.mxu0 0
      %413 = vmatpush1.bf16.msra.mxu0 0
      %414 = vmatprep.subr.bf16.mxu0 0
      %415 = vmatpush1.bf16.msra.mxu0 0
      %416 = vmatprep.subr.bf16.mxu0 0
      %417 = vmatpush1.bf16.msra.mxu0 0
      %418 = vmatprep.mubr.bf16.mxu0 0
      %419 = vmatmul.mubr.bf16.gmra.mrb[0].mxu0 %v250
      %v420 = vpop.f32.mrb[0].mxu0
      %v421 = vadd.f32 %v222, %v420
      %v422 = vpop.f32.mrb[0].mxu0
      %v423 = vadd.f32 %v226, %v422
      %v424 = vpop.f32.mrb[0].mxu0
      %v425 = vadd.f32 %v222, %v424
      %v426 = vpop.f32.mrb[0].mxu0
      %v427 = vadd.f32 %v226, %v426
      %428 = vmatprep.mubr.bf16.mxu0 0
      %429 = vmatmul.mubr.bf16.gmra.mrb[0].mxu0 %v251
      %v430 = vpop.f32.mrb[0].mxu0
      %v431 = vadd.f32 %v222, %v430
      %v432 = vpop.f32.mrb[0].mxu0
      %v433 = vadd.f32 %v226, %v432
      %v434 = vpop.f32.mrb[0].mxu0
      %v435 = vadd.f32 %v222, %v434
      %v436 = vpop.f32.mrb[0].mxu0
      %v437 = vadd.f32 %v226, %v436
      %438 = vmatprep.mubr.bf16.mxu0 0
      %439 = vmatmul.mubr.bf16.gmra.mrb[0].mxu0 %v252
      %v440 = vpop.f32.mrb[0].mxu0
      %v441 = vadd.f32 %v222, %v440
      %v442 = vpop.f32.mrb[0].mxu0
      %v443 = vadd.f32 %v226, %v442
      %v444 = vpop.f32.mrb[0].mxu0
      %v445 = vadd.f32 %v222, %v444
      %v446 = vpop.f32.mrb[0].mxu0
      %v447 = vadd.f32 %v226, %v446
      %448 = vmatprep.mubr.bf16.mxu0 0
      %449 = vmatmul.mubr.bf16.gmra.mrb[0].mxu0 %v253
      %v450 = vpop.f32.mrb[0].mxu0
      %v451 = vadd.f32 %v222, %v450
      %v452 = vpop.f32.mrb[0].mxu0
      %v453 = vadd.f32 %v226, %v452
      %v454 = vpop.f32.mrb[0].mxu0
      %v455 = vadd.f32 %v222, %v454
      %v456 = vpop.f32.mrb[0].mxu0
      %v457 = vadd.f32 %v226, %v456
      %458 = vdwg.mxu0
      %459 = vmatprep.subr.bf16.mxu0 0
      %460 = vmatpush1.bf16.msra.mxu0 %v340
      %461 = vmatprep.subr.bf16.mxu0 0
      %462 = vmatpush1.bf16.msra.mxu0 %v343
      %463 = vmatprep.subr.bf16.mxu0 0
      %464 = vmatpush1.bf16.msra.mxu0 %v346
      %465 = vmatprep.subr.bf16.mxu0 0
      %466 = vmatpush1.bf16.msra.mxu0 %v349
      %467 = vmatprep.subr.bf16.mxu0 0
      %468 = vmatpush1.bf16.msra.mxu0 %v352
      %469 = vmatprep.subr.bf16.mxu0 0
      %470 = vmatpush1.bf16.msra.mxu0 %v355
      %471 = vmatprep.subr.bf16.mxu0 0
      %472 = vmatpush1.bf16.msra.mxu0 %v358
      %473 = vmatprep.subr.bf16.mxu0 0
      %474 = vmatpush1.bf16.msra.mxu0 %v361
      %475 = vmatprep.subr.bf16.mxu0 0
      %476 = vmatpush1.bf16.msra.mxu0 0
      %477 = vmatprep.subr.bf16.mxu0 0
      %478 = vmatpush1.bf16.msra.mxu0 0
      %479 = vmatprep.subr.bf16.mxu0 0
      %480 = vmatpush1.bf16.msra.mxu0 0
      %481 = vmatprep.subr.bf16.mxu0 0
      %482 = vmatpush1.bf16.msra.mxu0 0
      %483 = vmatprep.subr.bf16.mxu0 0
      %484 = vmatpush1.bf16.msra.mxu0 0
      %485 = vmatprep.subr.bf16.mxu0 0
      %486 = vmatpush1.bf16.msra.mxu0 0
      %487 = vmatprep.subr.bf16.mxu0 0
      %488 = vmatpush1.bf16.msra.mxu0 0
      %489 = vmatprep.subr.bf16.mxu0 0
      %490 = vmatpush1.bf16.msra.mxu0 0
      %491 = vmatprep.mubr.bf16.mxu0 0
      %492 = vmatmul.mubr.bf16.gmra.mrb[0].mxu0 %v250
      %v493 = vpop.f32.mrb[0].mxu0
      %v494 = vadd.f32 %v230, %v493
      %v495 = vpop.f32.mrb[0].mxu0
      %v496 = vpop.f32.mrb[0].mxu0
      %v497 = vadd.f32 %v230, %v496
      %v498 = vpop.f32.mrb[0].mxu0
      %499 = vmatprep.mubr.bf16.mxu0 0
      %500 = vmatmul.mubr.bf16.gmra.mrb[0].mxu0 %v251
      %v501 = vpop.f32.mrb[0].mxu0
      %v502 = vadd.f32 %v230, %v501
      %v503 = vpop.f32.mrb[0].mxu0
      %v504 = vpop.f32.mrb[0].mxu0
      %v505 = vadd.f32 %v230, %v504
      %v506 = vpop.f32.mrb[0].mxu0
      %507 = vmatprep.mubr.bf16.mxu0 0
      %508 = vmatmul.mubr.bf16.gmra.mrb[0].mxu0 %v252
      %v509 = vpop.f32.mrb[0].mxu0
      %v510 = vadd.f32 %v230, %v509
      %v511 = vpop.f32.mrb[0].mxu0
      %v512 = vpop.f32.mrb[0].mxu0
      %v513 = vadd.f32 %v230, %v512
      %v514 = vpop.f32.mrb[0].mxu0
      %515 = vmatprep.mubr.bf16.mxu0 0
      %516 = vmatmul.mubr.bf16.gmra.mrb[0].mxu0 %v253
      %v517 = vpop.f32.mrb[0].mxu0
      %v518 = vadd.f32 %v230, %v517
      %v519 = vpop.f32.mrb[0].mxu0
      %v520 = vpop.f32.mrb[0].mxu0
      %v521 = vadd.f32 %v230, %v520
      %v522 = vpop.f32.mrb[0].mxu0
      %523 = vdwg.mxu0
      %v524 = vpack.c.bf16 %v425, %v421
      %v525 = vpack.c.bf16 %v427, %v423
      %v526 = vpack.c.bf16 %v497, %v494
      %v527 = vpack.c.bf16 %v435, %v431
      %v528 = vpack.c.bf16 %v437, %v433
      %v529 = vpack.c.bf16 %v505, %v502
      %v530 = vpack.c.bf16 %v445, %v441
      %v531 = vpack.c.bf16 %v447, %v443
      %v532 = vpack.c.bf16 %v513, %v510
      %v533 = vpack.c.bf16 %v455, %v451
      %v534 = vpack.c.bf16 %v457, %v453
      %v535 = vpack.c.bf16 %v521, %v518
      %v548 = vunpack.c.l.b16 %v524
      %v549 = vunpack.c.l.b16 %v525
      %v550 = vunpack.c.l.b16 %v526
      %v551 = vunpack.c.h.b16 %v524
      %v552 = vunpack.c.h.b16 %v525
      %v553 = vunpack.c.h.b16 %v526
      %v554 = vunpack.c.l.b16 %v527
      %v555 = vunpack.c.l.b16 %v528
      %v556 = vunpack.c.l.b16 %v529
      %v557 = vunpack.c.h.b16 %v527
      %v558 = vunpack.c.h.b16 %v528
      %v559 = vunpack.c.h.b16 %v529
      %v560 = vunpack.c.l.b16 %v530
      %v561 = vunpack.c.l.b16 %v531
      %v562 = vunpack.c.l.b16 %v532
      %v563 = vunpack.c.h.b16 %v530
      %v564 = vunpack.c.h.b16 %v531
      %v565 = vunpack.c.h.b16 %v532
      %v566 = vunpack.c.l.b16 %v533
      %v567 = vunpack.c.l.b16 %v534
      %v568 = vunpack.c.l.b16 %v535
      %v569 = vunpack.c.h.b16 %v533
      %v570 = vunpack.c.h.b16 %v534
      %v571 = vunpack.c.h.b16 %v535
      %v572 = vpack.c.b16 %v549, %v548
      %v573 = vpack.c.b16 %v550, %v550
      %v574 = vpack.c.b16 %v552, %v551
      %v575 = vpack.c.b16 %v553, %v553
      %v576 = vpack.c.b16 %v555, %v554
      %v577 = vpack.c.b16 %v556, %v556
      %v578 = vpack.c.b16 %v558, %v557
      %v579 = vpack.c.b16 %v559, %v559
      %v580 = vpack.c.b16 %v561, %v560
      %v581 = vpack.c.b16 %v562, %v562
      %v582 = vpack.c.b16 %v564, %v563
      %v583 = vpack.c.b16 %v565, %v565
      %v584 = vpack.c.b16 %v567, %v566
      %v585 = vpack.c.b16 %v568, %v568
      %v586 = vpack.c.b16 %v570, %v569
      %v587 = vpack.c.b16 %v571, %v571
      %604 = vst [vmem:[%s174] sm:$0xff] %v572
      %605 = vst [vmem:[%s174 + $0x8] sm:$0xf] %v573
      %606 = vst [vmem:[%s174 + $0xc] sm:$0xff] %v574
      %607 = vst [vmem:[%s174 + $0x14] sm:$0xf] %v575
      %608 = vst [vmem:[%s174 + $0x18] sm:$0xff] %v576
      %609 = vst [vmem:[%s174 + $0x20] sm:$0xf] %v577
      %610 = vst [vmem:[%s174 + $0x24] sm:$0xff] %v578
      %611 = vst [vmem:[%s174 + $0x2c] sm:$0xf] %v579
      %612 = vst [vmem:[%s174 + $0x30] sm:$0xff] %v580
      %613 = vst [vmem:[%s174 + $0x38] sm:$0xf] %v581
      %614 = vst [vmem:[%s174 + $0x3c] sm:$0xff] %v582
      %615 = vst [vmem:[%s174 + $0x44] sm:$0xf] %v583
      %616 = vst [vmem:[%s174 + $0x48] sm:$0xff] %v584
      %617 = vst [vmem:[%s174 + $0x50] sm:$0xf] %v585
      %618 = vst [vmem:[%s174 + $0x54] sm:$0xff] %v586
      %619 = vst [vmem:[%s174 + $0x5c] sm:$0xf] %v587
      %s620 = smul.u32 8, %s14
      %p621 = scmp.lt.s32.totalorder %s620, 15
      %s622 = scalar_select %p621, %s620, 15
      %s623 = smul.addr %s622, 3
      %s624 = smul.addr %s623, 4
      %s625 = scalar_lea.vmem %s3, %s624
      // Predicated region
      $region33: #{igru_sequence.2} parent=31 // pred_check
        %p626 = pneg %p100
      $region34: #{igru_sequence.2} parent=31 // pred_check_branch
        %628 = sbr.rel (%p626) target = $region36
      $region35: #{igru_sequence.2} parent=31 // pred_region
        %s629 = smul.u32 8, %s14
      $region36: #{igru_sequence.2} parent=31 // pred_fallthru
        _
    $region32: #{igru_sequence.2} parent=5 // pred_fallthru
      _
    %p630 = scmp.le.s32.totalorder 2, %s9
    // Predicated region
    $region37: #{igru_sequence.2} parent=5 // pred_check
      %p631 = pneg %p630
    $region38: #{igru_sequence.2} parent=5 // pred_check_branch
      %633 = sbr.rel (%p631) target = $region40
    $region39: #{igru_sequence.2} parent=5 // pred_region
      %s634 = ssub.s32 %s9, 2
      // Predicated region
      $region41: #{igru_sequence.2} parent=39 // pred_check
        %p635 = pneg %p106
      $region42: #{igru_sequence.2} parent=39 // pred_check_branch
        %637 = sbr.rel (%p635) target = $region44
      $region43: #{igru_sequence.2} parent=39 // pred_region
        %s638 = smul.u32 8, %s15
        %p639 = scmp.lt.s32.totalorder %s638, 15
        %s640 = scalar_select %p639, %s638, 15
        %s641 = smul.addr %s640, 3
        %s642 = smul.addr %s641, 4
        %s643 = scalar_lea.vmem %s3, %s642
      $region44: #{igru_sequence.2} parent=39 // pred_fallthru
        _
    $region40: #{igru_sequence.2} parent=5 // pred_fallthru
      _
  $region6: #{igru_sequence.2} parent=0 // loop_footer
    %s13 = sadd.s32 1, %s9
  $region7: #{igru_sequence.2} parent=0 // loop_footer_branch
    %8 = sbr.rel target = $region3
  $region8: #{igru_sequence.2} parent=0 // loop_exit
    _

// kernel: igru_sequence.3
$region0: #{igru_sequence.3}
  #allocation0 [shape = 'u32[]', space=smem, size = 0x4, offset = 0x4, fixed_abs, tag = 'smem constant byte address 0x4 - core index']
  #allocation1 [shape = 'u32[144,128]{1,0:T(1,128)}', space=vmem, size = 0x12000, scoped, tag = 'internal scratch']
  #allocation2 [shape = 'f32[16,128]{1,0:T(8,128)}', space=vmem, size = 0x2000, scoped, tag = 'scratch operand']
  #allocation3 [shape = 'bf16[128,256]{1,0:T(16,128)(2,1)}', space=vmem, size = 0x10000, scoped, tag = 'scratch operand']
  #allocation4 [shape = 'bf16[128,128]{1,0:T(16,128)(2,1)}', space=vmem, size = 0x8000, scoped, tag = 'scratch operand']
  #allocation5 [shape = 'bf16[128,128]{1,0:T(16,128)(2,1)}', space=vmem, size = 0x8000, scoped, tag = 'scratch operand']
  #allocation6 [shape = 's32[3]{0}', space=sflag, size = 0xc, scoped, tag = 'scratch operand']
  #allocation7 [shape = 's32[]', space=sflag, size = 0x4, offset = 0, fixed_abs, tag = 'sflag constant byte address 0x0 - dummy sync flag']
  #allocation8 [shape = 's32[]', space=sflag, size = 0x4, offset = 0, fixed_abs, tag = 'sflag constant byte address 0x0 - dummy sync flag']
  #allocation9 [shape = 's32[]', space=sflag, size = 0x4, offset = 0, fixed_abs, tag = 'sflag constant byte address 0x0 - dummy sync flag']
  %s0 = inlined_call_operand.vmem [shape: f32[16,128], index: 0, kind: input, shape index: {}]
  %s1 = inlined_call_operand.vmem [shape: bf16[8,16,384], index: 1, kind: input, shape index: {}]
  %s2 = inlined_call_operand.vmem [shape: bf16[128,256], index: 2, kind: input, shape index: {}]
  %s3 = inlined_call_operand.vmem [shape: bf16[128,128], index: 3, kind: input, shape index: {}]
  %s4 = inlined_call_operand.vmem [shape: bf16[128,128], index: 4, kind: input, shape index: {}]
  %s5 = inlined_call_operand.vmem [shape: f32[8,16,128], index: 5, kind: output, shape index: {}]
  %s6 = sld [smem:[#allocation0]]
  $region150: #{igru_sequence.3} parent=0
    _
  %s8 = ssub.s32 1, %s6
  %s9 = scalar_select 0, %s8, %s6
  loop: start=0, step=1, limit=4
  $region2: #{igru_sequence.3} parent=0 // loop_pre_header
    _
  $region3: #{igru_sequence.3} parent=0 // loop_header
    %s11 = sphi 0, %s15
    %p12 = scmp.ge.s32.totalorder %s11, 4
    %s18 = sphi 0, %s30
    %s19 = sphi 0, %s26
    %s20 = sphi 0, %s18
    %s21 = sphi 0, %s19
    %s22 = sphi 0, %s20
    %s23 = sphi 0, %s21
    %s33 = sphi 0, %s35
    %s36 = sphi 0, %s33
    %s37 = sphi 0, %s36
    %s53 = sphi 0, %s37
    %s61 = sphi 0, %s63
    %s64 = sphi 0, %s61
    %s65 = sphi 0, %s64
    %s81 = sphi 0, %s65
    %s89 = sphi 0, %s91
    %s92 = sphi 0, %s89
    %s93 = sphi 0, %s92
    %s109 = sphi 0, %s93
  $region4: #{igru_sequence.3} parent=0 // loop_header_branch
    %14 = sbr.rel (%p12) target = $region8
  $region5: #{igru_sequence.3} parent=0 // loop_body
    %s16 = ssub.s32 %s11, 1
    %s17 = ssub.s32 %s11, 2
    %s24 = sadd.s32 1, %s19
    %p25 = scmp.ge.s32.totalorder %s24, 2
    %s26 = scalar_select %p25, 0, %s24
    %s27 = sadd.s32 1, %s18
    %s28 = scalar_select %p25, %s27, %s18
    %p29 = scmp.ge.s32.totalorder %s28, 1
    %s30 = scalar_select %p29, 0, %s28
    %s31 = ssub.s32 %s18, %s30
    %p32 = scmp.eq.s32.totalorder %s31, 0
    %s34 = sadd.s32 %s33, 1
    %s35 = scalar_select %p32, %s33, %s34
    %p38 = pneg %p32
    %p39 = scmp.eq.s32.totalorder %s11, 1
    %p40 = por %p38, %p39
    %p41 = scmp.ne.s32.totalorder %s33, %s36
    %p42 = scmp.eq.s32.totalorder %s11, 0
    %p43 = por %p41, %p42
    %p44 = scmp.ne.s32.totalorder %s33, %s36
    %p45 = scmp.eq.s32.totalorder %s16, 1
    %p46 = por %p44, %p45
    %p47 = scmp.ne.s32.totalorder %s36, %s37
    %p48 = scmp.eq.s32.totalorder %s16, 0
    %p49 = por %p47, %p48
    %p50 = scmp.ne.s32.totalorder %s36, %s37
    %p51 = scmp.eq.s32.totalorder %s17, 1
    %p52 = por %p50, %p51
    %p54 = scmp.ne.s32.totalorder %s37, %s53
    %p55 = scmp.eq.s32.totalorder %s17, 0
    %p56 = por %p54, %p55
    %s57 = ssub.s32 %s19, %s26
    %s58 = ssub.s32 %s18, %s30
    %s59 = sor.u32 %s57, %s58
    %p60 = scmp.eq.s32.totalorder %s59, 0
    %s62 = sadd.s32 %s61, 1
    %s63 = scalar_select %p60, %s61, %s62
    %p66 = pneg %p60
    %p67 = scmp.eq.s32.totalorder %s11, 1
    %p68 = por %p66, %p67
    %p69 = scmp.ne.s32.totalorder %s61, %s64
    %p70 = scmp.eq.s32.totalorder %s11, 0
    %p71 = por %p69, %p70
    %p72 = scmp.ne.s32.totalorder %s61, %s64
    %p73 = scmp.eq.s32.totalorder %s16, 1
    %p74 = por %p72, %p73
    %p75 = scmp.ne.s32.totalorder %s64, %s65
    %p76 = scmp.eq.s32.totalorder %s16, 0
    %p77 = por %p75, %p76
    %p78 = scmp.ne.s32.totalorder %s64, %s65
    %p79 = scmp.eq.s32.totalorder %s17, 1
    %p80 = por %p78, %p79
    %p82 = scmp.ne.s32.totalorder %s65, %s81
    %p83 = scmp.eq.s32.totalorder %s17, 0
    %p84 = por %p82, %p83
    %s85 = ssub.s32 %s19, %s26
    %s86 = ssub.s32 %s18, %s30
    %s87 = sor.u32 %s85, %s86
    %p88 = scmp.eq.s32.totalorder %s87, 0
    %s90 = sadd.s32 %s89, 1
    %s91 = scalar_select %p88, %s89, %s90
    %p94 = pneg %p88
    %p95 = scmp.eq.s32.totalorder %s11, 1
    %p96 = por %p94, %p95
    %p97 = scmp.ne.s32.totalorder %s89, %s92
    %p98 = scmp.eq.s32.totalorder %s11, 0
    %p99 = por %p97, %p98
    %p100 = scmp.ne.s32.totalorder %s89, %s92
    %p101 = scmp.eq.s32.totalorder %s16, 1
    %p102 = por %p100, %p101
    %p103 = scmp.ne.s32.totalorder %s92, %s93
    %p104 = scmp.eq.s32.totalorder %s16, 0
    %p105 = por %p103, %p104
    %p106 = scmp.ne.s32.totalorder %s92, %s93
    %p107 = scmp.eq.s32.totalorder %s17, 1
    %p108 = por %p106, %p107
    %p110 = scmp.ne.s32.totalorder %s93, %s109
    %p111 = scmp.eq.s32.totalorder %s17, 0
    %p112 = por %p110, %p111
    %p113 = scmp.le.s32.totalorder 1, %s11
    %p114 = scmp.lt.s32.totalorder %s11, 3
    %p115 = pnand %p113, %p114
    %p116 = pneg %p115
    // Predicated region
    $region9: #{igru_sequence.3} parent=5 // pred_check
      _
    $region10: #{igru_sequence.3} parent=5 // pred_check_branch
      %118 = sbr.rel (%p115) target = $region12
    $region11: #{igru_sequence.3} parent=5 // pred_region
      %s119 = ssub.s32 %s11, 1
      // Predicated region
      $region13: #{igru_sequence.3} parent=11 // pred_check
        %p120 = pneg %p49
      $region14: #{igru_sequence.3} parent=11 // pred_check_branch
        %122 = sbr.rel (%p120) target = $region16
      $region15: #{igru_sequence.3} parent=11 // pred_region
        %s123 = smul.u32 2, %s20
        %p124 = scmp.lt.s32.totalorder %s123, 1
        %s125 = scalar_select %p124, %s123, 1
        %s126 = smul.addr %s125, 8
        %s127 = scalar_lea.vmem %s0, %s126
        %s128 = smul.u32 2, %s20
      $region16: #{igru_sequence.3} parent=11 // pred_fallthru
        _
    $region12: #{igru_sequence.3} parent=5 // pred_fallthru
      _
    %p129 = scmp.lt.s32.totalorder %s11, 2
    // Predicated region
    $region17: #{igru_sequence.3} parent=5 // pred_check
      %p130 = pneg %p129
    $region18: #{igru_sequence.3} parent=5 // pred_check_branch
      %132 = sbr.rel (%p130) target = $region20
    $region19: #{igru_sequence.3} parent=5 // pred_region
      // Predicated region
      $region21: #{igru_sequence.3} parent=19 // pred_check
        %p133 = pneg %p71
      $region22: #{igru_sequence.3} parent=19 // pred_check_branch
        %135 = sbr.rel (%p133) target = $region24
      $region23: #{igru_sequence.3} parent=19 // pred_region
        %s136 = smul.u32 4, %s19
        %s137 = smul.u32 2, %s18
        %p138 = scmp.lt.s32.totalorder %s136, 7
        %s139 = scalar_select %p138, %s136, 7
        %p140 = scmp.lt.s32.totalorder %s137, 1
        %s141 = scalar_select %p140, %s137, 1
        %s142 = smul.addr %s141, 3
        %s143 = smul.addr %s139, 6
        %s144 = sadd.s32 %s142, %s143
        %s145 = smul.addr %s144, 4
        %s146 = scalar_lea.vmem %s1, %s145
        %s147 = smul.u32 4, %s19
        %s148 = smul.u32 2, %s18
      $region24: #{igru_sequence.3} parent=19 // pred_fallthru
        _
    $region20: #{igru_sequence.3} parent=5 // pred_fallthru
      _
    %p149 = scmp.le.s32.totalorder 1, %s11
    %p150 = scmp.lt.s32.totalorder %s11, 3
    %p151 = pnand %p149, %p150
    %p152 = pneg %p151
    // Predicated region
    $region25: #{igru_sequence.3} parent=5 // pred_check
      _
    $region26: #{igru_sequence.3} parent=5 // pred_check_branch
      %154 = sbr.rel (%p151) target = $region28
    $region27: #{igru_sequence.3} parent=5 // pred_region
      %s155 = ssub.s32 %s11, 1
      %s156 = smul.u32 2, %s20
      %p157 = scmp.lt.s32.totalorder %s156, 1
      %s158 = scalar_select %p157, %s156, 1
      %s159 = smul.addr %s158, 8
      %s160 = scalar_lea.vmem %s0, %s159
      %p161 = pneg %p49
      %p162 = pneg %p46
      %s163 = smul.u32 4, %s21
      %s164 = smul.u32 2, %s20
      %p165 = scmp.lt.s32.totalorder %s163, 7
      %s166 = scalar_select %p165, %s163, 7
      %p167 = scmp.lt.s32.totalorder %s164, 1
      %s168 = scalar_select %p167, %s164, 1
      %s169 = smul.addr %s168, 3
      %s170 = smul.addr %s166, 6
      %s171 = sadd.s32 %s169, %s170
      %s172 = smul.addr %s171, 4
      %s173 = scalar_lea.vmem %s1, %s172
      %p174 = pneg %p77
      %p175 = pneg %p74
      %p176 = pneg %p105
      %p177 = pneg %p102
      %s178 = smul.u32 4, %s21
      %s179 = smul.u32 2, %s20
      %p180 = scmp.lt.s32.totalorder %s178, 7
      %s181 = scalar_select %p180, %s178, 7
      %p182 = scmp.lt.s32.totalorder %s179, 1
      %s183 = scalar_select %p182, %s179, 1
      %s184 = smul.addr %s181, 2
      %s185 = sadd.s32 %s183, %s184
      %s186 = smul.addr %s185, 8
      %s187 = scalar_lea.vmem %s5, %s186
      %s188 = smul.u32 2, %s20
      %p189 = scmp.lt.s32.totalorder %s188, 1
      %s190 = scalar_select %p189, %s188, 1
      %s191 = smul.addr %s190, 8
      %s192 = scalar_lea.vmem %s0, %s191
      %s193 = smul.u32 2, %s20
      %s194 = smul.u32 4, %s21
      %s195 = smul.u32 2, %s20
      %p196 = scmp.lt.s32.totalorder %s194, 7
      %s197 = scalar_select %p196, %s194, 7
      %p198 = scmp.lt.s32.totalorder %s195, 1
      %s199 = scalar_select %p198, %s195, 1
      %s200 = smul.addr %s199, 3
      %s201 = smul.addr %s197, 6
      %s202 = sadd.s32 %s200, %s201
      %s203 = smul.addr %s202, 4
      %s204 = scalar_lea.vmem %s1, %s203
      %s205 = smul.u32 4, %s21
      %s206 = smul.u32 2, %s20
      %s207 = smul.u32 4, %s21
      %s208 = smul.u32 2, %s20
      %p209 = scmp.lt.s32.totalorder %s207, 7
      %s210 = scalar_select %p209, %s207, 7
      %p211 = scmp.lt.s32.totalorder %s208, 1
      %s212 = scalar_select %p211, %s208, 1
      %s213 = smul.addr %s210, 2
      %s214 = sadd.s32 %s212, %s213
      %s215 = smul.addr %s214, 8
      %s216 = scalar_lea.vmem %s5, %s215
      %s217 = smul.u32 4, %s21
      %s218 = smul.u32 2, %s20
      %p220 = scmp.eq.s32.totalorder %s21, 0
      // Predicated region
      $region29: #{igru_sequence.3} parent=27 // pred_check
        %p221 = pneg %p220
      $region30: #{igru_sequence.3} parent=27 // pred_check_branch
        %223 = sbr.rel (%p221) target = $region32
      $region31: #{igru_sequence.3} parent=27 // pred_region
        %p225 = scmp.lt.u32.totalorder 4, 8
        %p226 = pneg %p225
        // Predicated region
        $region33: #{igru_sequence.3} parent=31 // pred_check
          _
        $region34: #{igru_sequence.3} parent=31 // pred_check_branch
          %228 = sbr.rel (%p225) target = $region36
        $region35: #{igru_sequence.3} parent=31 // pred_region
          %s305 = sand.u32 4, 7
          %p306 = scmp.eq.s32.totalorder %s305, 0
          %p307 = pneg %p306
          // Predicated region
          $region48: #{igru_sequence.3} parent=35 // pred_check
            _
          $region49: #{igru_sequence.3} parent=35 // pred_check_branch
            %309 = sbr.rel (%p306) target = $region51
          $region50: #{igru_sequence.3} parent=35 // pred_region
            %s310 = sand.u32 4, 7
            %s311 = ssub.s32 4, %s310
            %s312 = scalar_lea.vmem %s2, %s311
            %s313 = ssub.s32 4, %s310
            %s314 = scalar_lea.vmem [#allocation3], %s313
            loop: start=0, step=1, limit=1
            $region52: #{igru_sequence.3} parent=50 // loop_pre_header
              _
            $region53: #{igru_sequence.3} parent=50 // loop_header
              %s316 = sphi 0, %s320
              %p317 = scmp.ge.s32.totalorder %s316, 1
              %s321 = sphi %s2, %s2
              %s322 = sphi [#allocation3], [#allocation3]
            $region54: #{igru_sequence.3} parent=50 // loop_header_branch
              %319 = sbr.rel (%p317) target = $region58
            $region55: #{igru_sequence.3} parent=50 // loop_body
              _
            $region56: #{igru_sequence.3} parent=50 // loop_footer
              %s320 = sadd.s32 1, %s316
            $region57: #{igru_sequence.3} parent=50 // loop_footer_branch
              %315 = sbr.rel target = $region53
            $region58: #{igru_sequence.3} parent=50 // loop_exit
              _
            %s323 = sshllo.u32 0, %s310
            loop: start=0, step=1, limit=1
            $region59: #{igru_sequence.3} parent=50 // loop_pre_header
              _
            $region60: #{igru_sequence.3} parent=50 // loop_header
              %s325 = sphi 0, %s329
              %p326 = scmp.ge.s32.totalorder %s325, 1
              %s330 = sphi %s312, %s312
              %s331 = sphi %s314, %s314
            $region61: #{igru_sequence.3} parent=50 // loop_header_branch
              %328 = sbr.rel (%p326) target = $region65
            $region62: #{igru_sequence.3} parent=50 // loop_body
              %v332 = vld [vmem:[%s330] sm:%s323]
              %333 = vst [vmem:[%s331] sm:%s323] %v332
              %v334 = vld [vmem:[%s330 + $0x8] sm:%s323]
              %335 = vst [vmem:[%s331 + $0x4] sm:%s323] %v334
              %v336 = vld [vmem:[%s330 + $0x4] sm:%s323]
              %337 = vst [vmem:[%s331 + $0x8] sm:%s323] %v336
              %v338 = vld [vmem:[%s330 + $0xc] sm:%s323]
              %339 = vst [vmem:[%s331 + $0xc] sm:%s323] %v338
              %v340 = vld [vmem:[%s330 + $0x10] sm:%s323]
              %341 = vst [vmem:[%s331 + $0x10] sm:%s323] %v340
              %v342 = vld [vmem:[%s330 + $0x18] sm:%s323]
              %343 = vst [vmem:[%s331 + $0x14] sm:%s323] %v342
              %v344 = vld [vmem:[%s330 + $0x14] sm:%s323]
              %345 = vst [vmem:[%s331 + $0x18] sm:%s323] %v344
              %v346 = vld [vmem:[%s330 + $0x1c] sm:%s323]
              %347 = vst [vmem:[%s331 + $0x1c] sm:%s323] %v346
              %v348 = vld [vmem:[%s330 + $0x20] sm:%s323]
              %349 = vst [vmem:[%s331 + $0x20] sm:%s323] %v348
              %v350 = vld [vmem:[%s330 + $0x28] sm:%s323]
              %351 = vst [vmem:[%s331 + $0x24] sm:%s323] %v350
              %v352 = vld [vmem:[%s330 + $0x24] sm:%s323]
              %353 = vst [vmem:[%s331 + $0x28] sm:%s323] %v352
              %v354 = vld [vmem:[%s330 + $0x2c] sm:%s323]
              %355 = vst [vmem:[%s331 + $0x2c] sm:%s323] %v354
              %v356 = vld [vmem:[%s330 + $0x30] sm:%s323]
              %357 = vst [vmem:[%s331 + $0x30] sm:%s323] %v356
              %v358 = vld [vmem:[%s330 + $0x38] sm:%s323]
              %359 = vst [vmem:[%s331 + $0x34] sm:%s323] %v358
              %v360 = vld [vmem:[%s330 + $0x34] sm:%s323]
              %361 = vst [vmem:[%s331 + $0x38] sm:%s323] %v360
              %v362 = vld [vmem:[%s330 + $0x3c] sm:%s323]
              %363 = vst [vmem:[%s331 + $0x3c] sm:%s323] %v362
              %v364 = vld [vmem:[%s330 + $0x40] sm:%s323]
              %365 = vst [vmem:[%s331 + $0x40] sm:%s323] %v364
              %v366 = vld [vmem:[%s330 + $0x48] sm:%s323]
              %367 = vst [vmem:[%s331 + $0x44] sm:%s323] %v366
              %v368 = vld [vmem:[%s330 + $0x44] sm:%s323]
              %369 = vst [vmem:[%s331 + $0x48] sm:%s323] %v368
              %v370 = vld [vmem:[%s330 + $0x4c] sm:%s323]
              %371 = vst [vmem:[%s331 + $0x4c] sm:%s323] %v370
              %v372 = vld [vmem:[%s330 + $0x50] sm:%s323]
              %373 = vst [vmem:[%s331 + $0x50] sm:%s323] %v372
              %v374 = vld [vmem:[%s330 + $0x58] sm:%s323]
              %375 = vst [vmem:[%s331 + $0x54] sm:%s323] %v374
              %v376 = vld [vmem:[%s330 + $0x54] sm:%s323]
              %377 = vst [vmem:[%s331 + $0x58] sm:%s323] %v376
              %v378 = vld [vmem:[%s330 + $0x5c] sm:%s323]
              %379 = vst [vmem:[%s331 + $0x5c] sm:%s323] %v378
              %v380 = vld [vmem:[%s330 + $0x60] sm:%s323]
              %381 = vst [vmem:[%s331 + $0x60] sm:%s323] %v380
              %v382 = vld [vmem:[%s330 + $0x68] sm:%s323]
              %383 = vst [vmem:[%s331 + $0x64] sm:%s323] %v382
              %v384 = vld [vmem:[%s330 + $0x64] sm:%s323]
              %385 = vst [vmem:[%s331 + $0x68] sm:%s323] %v384
              %v386 = vld [vmem:[%s330 + $0x6c] sm:%s323]
              %387 = vst [vmem:[%s331 + $0x6c] sm:%s323] %v386
              %v388 = vld [vmem:[%s330 + $0x70] sm:%s323]
              %389 = vst [vmem:[%s331 + $0x70] sm:%s323] %v388
              %v390 = vld [vmem:[%s330 + $0x78] sm:%s323]
              %391 = vst [vmem:[%s331 + $0x74] sm:%s323] %v390
              %v392 = vld [vmem:[%s330 + $0x74] sm:%s323]
              %393 = vst [vmem:[%s331 + $0x78] sm:%s323] %v392
              %v394 = vld [vmem:[%s330 + $0x7c] sm:%s323]
              %395 = vst [vmem:[%s331 + $0x7c] sm:%s323] %v394
            $region63: #{igru_sequence.3} parent=50 // loop_footer
              %s329 = sadd.s32 1, %s325
            $region64: #{igru_sequence.3} parent=50 // loop_footer_branch
              %324 = sbr.rel target = $region60
            $region65: #{igru_sequence.3} parent=50 // loop_exit
              _
          $region51: #{igru_sequence.3} parent=35 // pred_fallthru
            _
        $region36: #{igru_sequence.3} parent=31 // pred_fallthru
          _
        // Predicated region
        $region37: #{igru_sequence.3} parent=31 // pred_check
          %p229 = pneg %p225
        $region38: #{igru_sequence.3} parent=31 // pred_check_branch
          %231 = sbr.rel (%p229) target = $region40
        $region39: #{igru_sequence.3} parent=31 // pred_region
          %s232 = sshllo.u32 0, 4
          loop: start=0, step=1, limit=1
          $region41: #{igru_sequence.3} parent=39 // loop_pre_header
            _
          $region42: #{igru_sequence.3} parent=39 // loop_header
            %s234 = sphi 0, %s238
            %p235 = scmp.ge.s32.totalorder %s234, 1
            %s239 = sphi %s2, %s2
            %s240 = sphi [#allocation3], [#allocation3]
          $region43: #{igru_sequence.3} parent=39 // loop_header_branch
            %237 = sbr.rel (%p235) target = $region47
          $region44: #{igru_sequence.3} parent=39 // loop_body
            %v241 = vld [vmem:[%s239] sm:%s232]
            %242 = vst [vmem:[%s240] sm:%s232] %v241
            %v243 = vld [vmem:[%s239 + $0x8] sm:%s232]
            %244 = vst [vmem:[%s240 + $0x4] sm:%s232] %v243
            %v245 = vld [vmem:[%s239 + $0x4] sm:%s232]
            %246 = vst [vmem:[%s240 + $0x8] sm:%s232] %v245
            %v247 = vld [vmem:[%s239 + $0xc] sm:%s232]
            %248 = vst [vmem:[%s240 + $0xc] sm:%s232] %v247
            %v249 = vld [vmem:[%s239 + $0x10] sm:%s232]
            %250 = vst [vmem:[%s240 + $0x10] sm:%s232] %v249
            %v251 = vld [vmem:[%s239 + $0x18] sm:%s232]
            %252 = vst [vmem:[%s240 + $0x14] sm:%s232] %v251
            %v253 = vld [vmem:[%s239 + $0x14] sm:%s232]
            %254 = vst [vmem:[%s240 + $0x18] sm:%s232] %v253
            %v255 = vld [vmem:[%s239 + $0x1c] sm:%s232]
            %256 = vst [vmem:[%s240 + $0x1c] sm:%s232] %v255
            %v257 = vld [vmem:[%s239 + $0x20] sm:%s232]
            %258 = vst [vmem:[%s240 + $0x20] sm:%s232] %v257
            %v259 = vld [vmem:[%s239 + $0x28] sm:%s232]
            %260 = vst [vmem:[%s240 + $0x24] sm:%s232] %v259
            %v261 = vld [vmem:[%s239 + $0x24] sm:%s232]
            %262 = vst [vmem:[%s240 + $0x28] sm:%s232] %v261
            %v263 = vld [vmem:[%s239 + $0x2c] sm:%s232]
            %264 = vst [vmem:[%s240 + $0x2c] sm:%s232] %v263
            %v265 = vld [vmem:[%s239 + $0x30] sm:%s232]
            %266 = vst [vmem:[%s240 + $0x30] sm:%s232] %v265
            %v267 = vld [vmem:[%s239 + $0x38] sm:%s232]
            %268 = vst [vmem:[%s240 + $0x34] sm:%s232] %v267
            %v269 = vld [vmem:[%s239 + $0x34] sm:%s232]
            %270 = vst [vmem:[%s240 + $0x38] sm:%s232] %v269
            %v271 = vld [vmem:[%s239 + $0x3c] sm:%s232]
            %272 = vst [vmem:[%s240 + $0x3c] sm:%s232] %v271
            %v273 = vld [vmem:[%s239 + $0x40] sm:%s232]
            %274 = vst [vmem:[%s240 + $0x40] sm:%s232] %v273
            %v275 = vld [vmem:[%s239 + $0x48] sm:%s232]
            %276 = vst [vmem:[%s240 + $0x44] sm:%s232] %v275
            %v277 = vld [vmem:[%s239 + $0x44] sm:%s232]
            %278 = vst [vmem:[%s240 + $0x48] sm:%s232] %v277
            %v279 = vld [vmem:[%s239 + $0x4c] sm:%s232]
            %280 = vst [vmem:[%s240 + $0x4c] sm:%s232] %v279
            %v281 = vld [vmem:[%s239 + $0x50] sm:%s232]
            %282 = vst [vmem:[%s240 + $0x50] sm:%s232] %v281
            %v283 = vld [vmem:[%s239 + $0x58] sm:%s232]
            %284 = vst [vmem:[%s240 + $0x54] sm:%s232] %v283
            %v285 = vld [vmem:[%s239 + $0x54] sm:%s232]
            %286 = vst [vmem:[%s240 + $0x58] sm:%s232] %v285
            %v287 = vld [vmem:[%s239 + $0x5c] sm:%s232]
            %288 = vst [vmem:[%s240 + $0x5c] sm:%s232] %v287
            %v289 = vld [vmem:[%s239 + $0x60] sm:%s232]
            %290 = vst [vmem:[%s240 + $0x60] sm:%s232] %v289
            %v291 = vld [vmem:[%s239 + $0x68] sm:%s232]
            %292 = vst [vmem:[%s240 + $0x64] sm:%s232] %v291
            %v293 = vld [vmem:[%s239 + $0x64] sm:%s232]
            %294 = vst [vmem:[%s240 + $0x68] sm:%s232] %v293
            %v295 = vld [vmem:[%s239 + $0x6c] sm:%s232]
            %296 = vst [vmem:[%s240 + $0x6c] sm:%s232] %v295
            %v297 = vld [vmem:[%s239 + $0x70] sm:%s232]
            %298 = vst [vmem:[%s240 + $0x70] sm:%s232] %v297
            %v299 = vld [vmem:[%s239 + $0x78] sm:%s232]
            %300 = vst [vmem:[%s240 + $0x74] sm:%s232] %v299
            %v301 = vld [vmem:[%s239 + $0x74] sm:%s232]
            %302 = vst [vmem:[%s240 + $0x78] sm:%s232] %v301
            %v303 = vld [vmem:[%s239 + $0x7c] sm:%s232]
            %304 = vst [vmem:[%s240 + $0x7c] sm:%s232] %v303
          $region45: #{igru_sequence.3} parent=39 // loop_footer
            %s238 = sadd.s32 1, %s234
          $region46: #{igru_sequence.3} parent=39 // loop_footer_branch
            %233 = sbr.rel target = $region42
          $region47: #{igru_sequence.3} parent=39 // loop_exit
            _
        $region40: #{igru_sequence.3} parent=31 // pred_fallthru
          _
        // Predicated region
        $region66: #{igru_sequence.3} parent=31 // pred_check
          _
        $region67: #{igru_sequence.3} parent=31 // pred_check_branch
          %398 = sbr.rel (0) target = $region69
        $region68: #{igru_sequence.3} parent=31 // pred_region
          %399 = vsyncadd [#allocation6], 2048
        $region69: #{igru_sequence.3} parent=31 // pred_fallthru
          _
        %s400 = scalar_lea.sflag [#allocation6], 1
        %p402 = scmp.lt.u32.totalorder 64, 8
        %p403 = pneg %p402
        // Predicated region
        $region70: #{igru_sequence.3} parent=31 // pred_check
          _
        $region71: #{igru_sequence.3} parent=31 // pred_check_branch
          %405 = sbr.rel (%p402) target = $region73
        $region72: #{igru_sequence.3} parent=31 // pred_region
          %s420 = sand.u32 64, 7
          %p421 = scmp.eq.s32.totalorder %s420, 0
          // Predicated region
          $region85: #{igru_sequence.3} parent=72 // pred_check
            %p422 = pneg %p421
          $region86: #{igru_sequence.3} parent=72 // pred_check_branch
            %424 = sbr.rel (%p422) target = $region88
          $region87: #{igru_sequence.3} parent=72 // pred_region
            loop: start=0, step=1, limit=1
            $region89: #{igru_sequence.3} parent=87 // loop_pre_header
              _
            $region90: #{igru_sequence.3} parent=87 // loop_header
              %s426 = sphi 0, %s430
              %p427 = scmp.ge.s32.totalorder %s426, 1
              %s431 = sphi %s3, %s3
              %s432 = sphi [#allocation4], [#allocation4]
            $region91: #{igru_sequence.3} parent=87 // loop_header_branch
              %429 = sbr.rel (%p427) target = $region95
            $region92: #{igru_sequence.3} parent=87 // loop_body
              %v433 = vld [vmem:[%s431] sm:$0xff]
              %434 = vst [vmem:[%s432] sm:$0xff] %v433
              %v435 = vld [vmem:[%s431 + $0x8] sm:$0xff]
              %436 = vst [vmem:[%s432 + $0x8] sm:$0xff] %v435
              %v437 = vld [vmem:[%s431 + $0x10] sm:$0xff]
              %438 = vst [vmem:[%s432 + $0x10] sm:$0xff] %v437
              %v439 = vld [vmem:[%s431 + $0x18] sm:$0xff]
              %440 = vst [vmem:[%s432 + $0x18] sm:$0xff] %v439
              %v441 = vld [vmem:[%s431 + $0x20] sm:$0xff]
              %442 = vst [vmem:[%s432 + $0x20] sm:$0xff] %v441
              %v443 = vld [vmem:[%s431 + $0x28] sm:$0xff]
              %444 = vst [vmem:[%s432 + $0x28] sm:$0xff] %v443
              %v445 = vld [vmem:[%s431 + $0x30] sm:$0xff]
              %446 = vst [vmem:[%s432 + $0x30] sm:$0xff] %v445
              %v447 = vld [vmem:[%s431 + $0x38] sm:$0xff]
              %448 = vst [vmem:[%s432 + $0x38] sm:$0xff] %v447
            $region93: #{igru_sequence.3} parent=87 // loop_footer
              %s430 = sadd.s32 1, %s426
            $region94: #{igru_sequence.3} parent=87 // loop_footer_branch
              %425 = sbr.rel target = $region90
            $region95: #{igru_sequence.3} parent=87 // loop_exit
              _
          $region88: #{igru_sequence.3} parent=72 // pred_fallthru
            _
          %p449 = pneg %p421
          // Predicated region
          $region96: #{igru_sequence.3} parent=72 // pred_check
            _
          $region97: #{igru_sequence.3} parent=72 // pred_check_branch
            %451 = sbr.rel (%p421) target = $region99
          $region98: #{igru_sequence.3} parent=72 // pred_region
            %s452 = sand.u32 64, 7
          $region99: #{igru_sequence.3} parent=72 // pred_fallthru
            _
        $region73: #{igru_sequence.3} parent=31 // pred_fallthru
          _
        // Predicated region
        $region74: #{igru_sequence.3} parent=31 // pred_check
          %p406 = pneg %p402
        $region75: #{igru_sequence.3} parent=31 // pred_check_branch
          %408 = sbr.rel (%p406) target = $region77
        $region76: #{igru_sequence.3} parent=31 // pred_region
          %s409 = sshllo.u32 0, 64
          loop: start=0, step=1, limit=1
          $region78: #{igru_sequence.3} parent=76 // loop_pre_header
            _
          $region79: #{igru_sequence.3} parent=76 // loop_header
            %s411 = sphi 0, %s415
            %p412 = scmp.ge.s32.totalorder %s411, 1
            %s416 = sphi %s3, %s3
            %s417 = sphi [#allocation4], [#allocation4]
          $region80: #{igru_sequence.3} parent=76 // loop_header_branch
            %414 = sbr.rel (%p412) target = $region84
          $region81: #{igru_sequence.3} parent=76 // loop_body
            %v418 = vld [vmem:[%s416] sm:%s409]
            %419 = vst [vmem:[%s417] sm:%s409] %v418
          $region82: #{igru_sequence.3} parent=76 // loop_footer
            %s415 = sadd.s32 1, %s411
          $region83: #{igru_sequence.3} parent=76 // loop_footer_branch
            %410 = sbr.rel target = $region79
          $region84: #{igru_sequence.3} parent=76 // loop_exit
            _
        $region77: #{igru_sequence.3} parent=31 // pred_fallthru
          _
        // Predicated region
        $region100: #{igru_sequence.3} parent=31 // pred_check
          _
        $region101: #{igru_sequence.3} parent=31 // pred_check_branch
          %455 = sbr.rel (0) target = $region103
        $region102: #{igru_sequence.3} parent=31 // pred_region
          %456 = vsyncadd %s400, 1024
        $region103: #{igru_sequence.3} parent=31 // pred_fallthru
          _
        %s457 = scalar_lea.sflag [#allocation6], 2
        %p459 = scmp.lt.u32.totalorder 64, 8
        %p460 = pneg %p459
        // Predicated region
        $region104: #{igru_sequence.3} parent=31 // pred_check
          _
        $region105: #{igru_sequence.3} parent=31 // pred_check_branch
          %462 = sbr.rel (%p459) target = $region107
        $region106: #{igru_sequence.3} parent=31 // pred_region
          %s477 = sand.u32 64, 7
          %p478 = scmp.eq.s32.totalorder %s477, 0
          // Predicated region
          $region119: #{igru_sequence.3} parent=106 // pred_check
            %p479 = pneg %p478
          $region120: #{igru_sequence.3} parent=106 // pred_check_branch
            %481 = sbr.rel (%p479) target = $region122
          $region121: #{igru_sequence.3} parent=106 // pred_region
            loop: start=0, step=1, limit=1
            $region123: #{igru_sequence.3} parent=121 // loop_pre_header
              _
            $region124: #{igru_sequence.3} parent=121 // loop_header
              %s483 = sphi 0, %s487
              %p484 = scmp.ge.s32.totalorder %s483, 1
              %s488 = sphi %s4, %s4
              %s489 = sphi [#allocation5], [#allocation5]
            $region125: #{igru_sequence.3} parent=121 // loop_header_branch
              %486 = sbr.rel (%p484) target = $region129
            $region126: #{igru_sequence.3} parent=121 // loop_body
              %v490 = vld [vmem:[%s488] sm:$0xff]
              %491 = vst [vmem:[%s489] sm:$0xff] %v490
              %v492 = vld [vmem:[%s488 + $0x8] sm:$0xff]
              %493 = vst [vmem:[%s489 + $0x8] sm:$0xff] %v492
              %v494 = vld [vmem:[%s488 + $0x10] sm:$0xff]
              %495 = vst [vmem:[%s489 + $0x10] sm:$0xff] %v494
              %v496 = vld [vmem:[%s488 + $0x18] sm:$0xff]
              %497 = vst [vmem:[%s489 + $0x18] sm:$0xff] %v496
              %v498 = vld [vmem:[%s488 + $0x20] sm:$0xff]
              %499 = vst [vmem:[%s489 + $0x20] sm:$0xff] %v498
              %v500 = vld [vmem:[%s488 + $0x28] sm:$0xff]
              %501 = vst [vmem:[%s489 + $0x28] sm:$0xff] %v500
              %v502 = vld [vmem:[%s488 + $0x30] sm:$0xff]
              %503 = vst [vmem:[%s489 + $0x30] sm:$0xff] %v502
              %v504 = vld [vmem:[%s488 + $0x38] sm:$0xff]
              %505 = vst [vmem:[%s489 + $0x38] sm:$0xff] %v504
            $region127: #{igru_sequence.3} parent=121 // loop_footer
              %s487 = sadd.s32 1, %s483
            $region128: #{igru_sequence.3} parent=121 // loop_footer_branch
              %482 = sbr.rel target = $region124
            $region129: #{igru_sequence.3} parent=121 // loop_exit
              _
          $region122: #{igru_sequence.3} parent=106 // pred_fallthru
            _
          %p506 = pneg %p478
          // Predicated region
          $region130: #{igru_sequence.3} parent=106 // pred_check
            _
          $region131: #{igru_sequence.3} parent=106 // pred_check_branch
            %508 = sbr.rel (%p478) target = $region133
          $region132: #{igru_sequence.3} parent=106 // pred_region
            %s509 = sand.u32 64, 7
          $region133: #{igru_sequence.3} parent=106 // pred_fallthru
            _
        $region107: #{igru_sequence.3} parent=31 // pred_fallthru
          _
        // Predicated region
        $region108: #{igru_sequence.3} parent=31 // pred_check
          %p463 = pneg %p459
        $region109: #{igru_sequence.3} parent=31 // pred_check_branch
          %465 = sbr.rel (%p463) target = $region111
        $region110: #{igru_sequence.3} parent=31 // pred_region
          %s466 = sshllo.u32 0, 64
          loop: start=0, step=1, limit=1
          $region112: #{igru_sequence.3} parent=110 // loop_pre_header
            _
          $region113: #{igru_sequence.3} parent=110 // loop_header
            %s468 = sphi 0, %s472
            %p469 = scmp.ge.s32.totalorder %s468, 1
            %s473 = sphi %s4, %s4
            %s474 = sphi [#allocation5], [#allocation5]
          $region114: #{igru_sequence.3} parent=110 // loop_header_branch
            %471 = sbr.rel (%p469) target = $region118
          $region115: #{igru_sequence.3} parent=110 // loop_body
            %v475 = vld [vmem:[%s473] sm:%s466]
            %476 = vst [vmem:[%s474] sm:%s466] %v475
          $region116: #{igru_sequence.3} parent=110 // loop_footer
            %s472 = sadd.s32 1, %s468
          $region117: #{igru_sequence.3} parent=110 // loop_footer_branch
            %467 = sbr.rel target = $region113
          $region118: #{igru_sequence.3} parent=110 // loop_exit
            _
        $region111: #{igru_sequence.3} parent=31 // pred_fallthru
          _
        // Predicated region
        $region134: #{igru_sequence.3} parent=31 // pred_check
          _
        $region135: #{igru_sequence.3} parent=31 // pred_check_branch
          %512 = sbr.rel (0) target = $region137
        $region136: #{igru_sequence.3} parent=31 // pred_region
          %513 = vsyncadd %s457, 1024
        $region137: #{igru_sequence.3} parent=31 // pred_fallthru
          _
        %s514 = smul.u32 4, 16
        %s515 = smul.u32 %s514, 2
        %s516 = sshll.u32 %s515, 4
        %517 = dma.done [#allocation6], %s516
        %s518 = smul.u32 %s514, 1
        %s519 = sshll.u32 %s518, 4
        %520 = dma.done %s400, %s519
        %s521 = sshll.u32 %s518, 4
        %522 = dma.done %s457, %s521
        %v523 = vld [vmem:[%s192] sm:$0xff]
        %v524 = vld [vmem:[%s192 + $0x8] sm:$0xff]
        %525 = vst [vmem:[#allocation2] sm:$0xff] %v523
        %526 = vst [vmem:[#allocation2 + $0x8] sm:$0xff] %v524
      $region32: #{igru_sequence.3} parent=27 // pred_fallthru
        _
      %v527 = vld [vmem:[#allocation2] sm:$0xff]
      %v528 = vld [vmem:[#allocation2 + $0x8] sm:$0xff]
      %v529 = vld [vmem:[#allocation3] sm:$0xff]
      %v530 = vld [vmem:[#allocation3 + $0x8] sm:$0xff]
      %v531 = vld [vmem:[#allocation3 + $0x10] sm:$0xff]
      %v532 = vld [vmem:[#allocation3 + $0x18] sm:$0xff]
      %v533 = vld [vmem:[#allocation3 + $0x20] sm:$0xff]
      %v534 = vld [vmem:[#allocation3 + $0x28] sm:$0xff]
      %v535 = vld [vmem:[#allocation3 + $0x30] sm:$0xff]
      %v536 = vld [vmem:[#allocation3 + $0x38] sm:$0xff]
      %v537 = vld [vmem:[#allocation3 + $0x40] sm:$0xff]
      %v538 = vld [vmem:[#allocation3 + $0x48] sm:$0xff]
      %v539 = vld [vmem:[#allocation3 + $0x50] sm:$0xff]
      %v540 = vld [vmem:[#allocation3 + $0x58] sm:$0xff]
      %v541 = vld [vmem:[#allocation3 + $0x60] sm:$0xff]
      %v542 = vld [vmem:[#allocation3 + $0x68] sm:$0xff]
      %v543 = vld [vmem:[#allocation3 + $0x70] sm:$0xff]
      %v544 = vld [vmem:[#allocation3 + $0x78] sm:$0xff]
      %v545 = vld [vmem:[#allocation4] sm:$0xff]
      %v546 = vld [vmem:[#allocation4 + $0x8] sm:$0xff]
      %v547 = vld [vmem:[#allocation4 + $0x10] sm:$0xff]
      %v548 = vld [vmem:[#allocation4 + $0x18] sm:$0xff]
      %v549 = vld [vmem:[#allocation4 + $0x20] sm:$0xff]
      %v550 = vld [vmem:[#allocation4 + $0x28] sm:$0xff]
      %v551 = vld [vmem:[#allocation4 + $0x30] sm:$0xff]
      %v552 = vld [vmem:[#allocation4 + $0x38] sm:$0xff]
      %v553 = vld [vmem:[#allocation5] sm:$0xff]
      %v554 = vld [vmem:[#allocation5 + $0x8] sm:$0xff]
      %v555 = vld [vmem:[#allocation5 + $0x10] sm:$0xff]
      %v556 = vld [vmem:[#allocation5 + $0x18] sm:$0xff]
      %v557 = vld [vmem:[#allocation5 + $0x20] sm:$0xff]
      %v558 = vld [vmem:[#allocation5 + $0x28] sm:$0xff]
      %v559 = vld [vmem:[#allocation5 + $0x30] sm:$0xff]
      %v560 = vld [vmem:[#allocation5 + $0x38] sm:$0xff]
      %v561 = vld [vmem:[%s204] sm:$0xff]
      %v562 = vld [vmem:[%s204 + $0x8] sm:$0xf]
      %v563 = vld [vmem:[%s204 + $0xc] sm:$0xff]
      %v564 = vld [vmem:[%s204 + $0x14] sm:$0xf]
      %v565 = vunpack.c.l.bf16 %v561
      %v566 = vunpack.c.h.bf16 %v561
      %v567 = vunpack.c.l.bf16 %v562
      %v568 = vunpack.c.l.bf16 %v563
      %v569 = vunpack.c.h.bf16 %v563
      %v570 = vunpack.c.l.bf16 %v564
      %v571 = vpack.c.bf16 %v528, %v527
      %572 = vmatprep.subr.bf16.mxu0 %v530
      %573 = vmatpush1.bf16.msra.mxu0 %v529
      %574 = vmatprep.subr.bf16.mxu0 %v532
      %575 = vmatpush1.bf16.msra.mxu0 %v531
      %576 = vmatprep.subr.bf16.mxu0 %v534
      %577 = vmatpush1.bf16.msra.mxu0 %v533
      %578 = vmatprep.subr.bf16.mxu0 %v536
      %579 = vmatpush1.bf16.msra.mxu0 %v535
      %580 = vmatprep.subr.bf16.mxu0 %v538
      %581 = vmatpush1.bf16.msra.mxu0 %v537
      %582 = vmatprep.subr.bf16.mxu0 %v540
      %583 = vmatpush1.bf16.msra.mxu0 %v539
      %584 = vmatprep.subr.bf16.mxu0 %v542
      %585 = vmatpush1.bf16.msra.mxu0 %v541
      %586 = vmatprep.subr.bf16.mxu0 %v544
      %587 = vmatpush1.bf16.msra.mxu0 %v543
      %588 = vmatprep.subr.bf16.mxu0 0
      %589 = vmatpush1.bf16.msra.mxu0 0
      %590 = vmatprep.subr.bf16.mxu0 0
      %591 = vmatpush1.bf16.msra.mxu0 0
      %592 = vmatprep.subr.bf16.mxu0 0
      %593 = vmatpush1.bf16.msra.mxu0 0
      %594 = vmatprep.subr.bf16.mxu0 0
      %595 = vmatpush1.bf16.msra.mxu0 0
      %596 = vmatprep.subr.bf16.mxu0 0
      %597 = vmatpush1.bf16.msra.mxu0 0
      %598 = vmatprep.subr.bf16.mxu0 0
      %599 = vmatpush1.bf16.msra.mxu0 0
      %600 = vmatprep.subr.bf16.mxu0 0
      %601 = vmatpush1.bf16.msra.mxu0 0
      %602 = vmatprep.subr.bf16.mxu0 0
      %603 = vmatpush1.bf16.msra.mxu0 0
      %604 = vmatprep.mubr.bf16.mxu0 0
      %605 = vmatmul.mubr.bf16.gmra.mrb[0].mxu0 %v571
      %v606 = vpop.f32.mrb[0].mxu0
      %v607 = vadd.f32 0.0, %v606
      %v608 = vpop.f32.mrb[0].mxu0
      %v609 = vadd.f32 0.0, %v608
      %v610 = vpop.f32.mrb[0].mxu0
      %v611 = vadd.f32 0.0, %v610
      %v612 = vpop.f32.mrb[0].mxu0
      %v613 = vadd.f32 0.0, %v612
      %614 = vdwg.mxu0
      %v615 = vadd.f32 %v565, %v607
      %v616 = vadd.f32 %v566, %v609
      %v617 = vadd.f32 %v568, %v611
      %v618 = vadd.f32 %v569, %v613
      %v619 = vxor.u32 %v615, 2147483648
      %v620 = vxor.u32 %v616, 2147483648
      %v621 = vxor.u32 %v617, 2147483648
      %v622 = vxor.u32 %v618, 2147483648
      %v623 = vmul.f32 %v619, 1.442695
      %v624 = vpow.pop %v623
      %v625 = vmul.f32 %v620, 1.442695
      %v626 = vpow.pop %v625
      %v627 = vmul.f32 %v621, 1.442695
      %v628 = vpow.pop %v627
      %v629 = vmul.f32 %v622, 1.442695
      %v630 = vpow.pop %v629
      %v631 = vadd.f32 %v624, 1.0
      %v632 = vadd.f32 %v626, 1.0
      %v633 = vadd.f32 %v628, 1.0
      %v634 = vadd.f32 %v630, 1.0
      %v635 = vrcp.pop %v631
      %v636 = vmul.f32 1.0, %v635
      %v637 = vrcp.pop %v632
      %v638 = vmul.f32 1.0, %v637
      %v639 = vrcp.pop %v633
      %v640 = vmul.f32 1.0, %v639
      %v641 = vrcp.pop %v634
      %v642 = vmul.f32 1.0, %v641
      %v643 = vmul.f32 %v638, %v527
      %v644 = vmul.f32 %v642, %v528
      %v645 = vpack.c.bf16 %v644, %v643
      %646 = vmatprep.subr.bf16.mxu0 0
      %647 = vmatpush1.bf16.msra.mxu0 %v545
      %648 = vmatprep.subr.bf16.mxu0 0
      %649 = vmatpush1.bf16.msra.mxu0 %v546
      %650 = vmatprep.subr.bf16.mxu0 0
      %651 = vmatpush1.bf16.msra.mxu0 %v547
      %652 = vmatprep.subr.bf16.mxu0 0
      %653 = vmatpush1.bf16.msra.mxu0 %v548
      %654 = vmatprep.subr.bf16.mxu0 0
      %655 = vmatpush1.bf16.msra.mxu0 %v549
      %656 = vmatprep.subr.bf16.mxu0 0
      %657 = vmatpush1.bf16.msra.mxu0 %v550
      %658 = vmatprep.subr.bf16.mxu0 0
      %659 = vmatpush1.bf16.msra.mxu0 %v551
      %660 = vmatprep.subr.bf16.mxu0 0
      %661 = vmatpush1.bf16.msra.mxu0 %v552
      %662 = vmatprep.subr.bf16.mxu0 0
      %663 = vmatpush1.bf16.msra.mxu0 0
      %664 = vmatprep.subr.bf16.mxu0 0
      %665 = vmatpush1.bf16.msra.mxu0 0
      %666 = vmatprep.subr.bf16.mxu0 0
      %667 = vmatpush1.bf16.msra.mxu0 0
      %668 = vmatprep.subr.bf16.mxu0 0
      %669 = vmatpush1.bf16.msra.mxu0 0
      %670 = vmatprep.subr.bf16.mxu0 0
      %671 = vmatpush1.bf16.msra.mxu0 0
      %672 = vmatprep.subr.bf16.mxu0 0
      %673 = vmatpush1.bf16.msra.mxu0 0
      %674 = vmatprep.subr.bf16.mxu0 0
      %675 = vmatpush1.bf16.msra.mxu0 0
      %676 = vmatprep.subr.bf16.mxu0 0
      %677 = vmatpush1.bf16.msra.mxu0 0
      %678 = vmatprep.mubr.bf16.mxu0 0
      %679 = vmatmul.mubr.bf16.gmra.mrb[0].mxu0 %v645
      %v680 = vpop.f32.mrb[0].mxu0
      %v681 = vadd.f32 0.0, %v680
      %v682 = vpop.f32.mrb[0].mxu0
      %v683 = vpop.f32.mrb[0].mxu0
      %v684 = vadd.f32 0.0, %v683
      %v685 = vpop.f32.mrb[0].mxu0
      %686 = vdwg.mxu0
      %v687 = vadd.f32 %v567, %v681
      %v688 = vadd.f32 %v570, %v684
      %v689 = vtanh.pop %v687
      %v690 = vtanh.pop %v688
      %v691 = vpack.c.bf16 %v690, %v689
      %692 = vmatprep.subr.bf16.mxu0 0
      %693 = vmatpush1.bf16.msra.mxu0 %v553
      %694 = vmatprep.subr.bf16.mxu0 0
      %695 = vmatpush1.bf16.msra.mxu0 %v554
      %696 = vmatprep.subr.bf16.mxu0 0
      %697 = vmatpush1.bf16.msra.mxu0 %v555
      %698 = vmatprep.subr.bf16.mxu0 0
      %699 = vmatpush1.bf16.msra.mxu0 %v556
      %700 = vmatprep.subr.bf16.mxu0 0
      %701 = vmatpush1.bf16.msra.mxu0 %v557
      %702 = vmatprep.subr.bf16.mxu0 0
      %703 = vmatpush1.bf16.msra.mxu0 %v558
      %704 = vmatprep.subr.bf16.mxu0 0
      %705 = vmatpush1.bf16.msra.mxu0 %v559
      %706 = vmatprep.subr.bf16.mxu0 0
      %707 = vmatpush1.bf16.msra.mxu0 %v560
      %708 = vmatprep.subr.bf16.mxu0 0
      %709 = vmatpush1.bf16.msra.mxu0 0
      %710 = vmatprep.subr.bf16.mxu0 0
      %711 = vmatpush1.bf16.msra.mxu0 0
      %712 = vmatprep.subr.bf16.mxu0 0
      %713 = vmatpush1.bf16.msra.mxu0 0
      %714 = vmatprep.subr.bf16.mxu0 0
      %715 = vmatpush1.bf16.msra.mxu0 0
      %716 = vmatprep.subr.bf16.mxu0 0
      %717 = vmatpush1.bf16.msra.mxu0 0
      %718 = vmatprep.subr.bf16.mxu0 0
      %719 = vmatpush1.bf16.msra.mxu0 0
      %720 = vmatprep.subr.bf16.mxu0 0
      %721 = vmatpush1.bf16.msra.mxu0 0
      %722 = vmatprep.subr.bf16.mxu0 0
      %723 = vmatpush1.bf16.msra.mxu0 0
      %724 = vmatprep.mubr.bf16.mxu0 0
      %725 = vmatmul.mubr.bf16.gmra.mrb[0].mxu0 %v691
      %v726 = vpop.f32.mrb[0].mxu0
      %v727 = vadd.f32 0.0, %v726
      %v728 = vpop.f32.mrb[0].mxu0
      %v729 = vpop.f32.mrb[0].mxu0
      %v730 = vadd.f32 0.0, %v729
      %v731 = vpop.f32.mrb[0].mxu0
      %732 = vdwg.mxu0
      %v733 = vmul.f32 %v636, %v527
      %v734 = vmul.f32 %v640, %v528
      %v735 = vsub.f32 1.0, %v636
      %v736 = vsub.f32 1.0, %v640
      %v737 = vmul.f32 %v735, %v727
      %v738 = vmul.f32 %v736, %v730
      %v739 = vadd.f32 %v733, %v737
      %v740 = vadd.f32 %v734, %v738
      %741 = vst [vmem:[%s216] sm:$0xff] %v739
      %742 = vst [vmem:[%s216 + $0x8] sm:$0xff] %v740
      %s743 = scalar_lea.vmem %s204, 24
      %v744 = vld [vmem:[%s743] sm:$0xff]
      %v745 = vld [vmem:[%s743 + $0x8] sm:$0xf]
      %v746 = vld [vmem:[%s743 + $0xc] sm:$0xff]
      %v747 = vld [vmem:[%s743 + $0x14] sm:$0xf]
      %v748 = vunpack.c.l.bf16 %v744
      %v749 = vunpack.c.h.bf16 %v744
      %v750 = vunpack.c.l.bf16 %v745
      %v751 = vunpack.c.l.bf16 %v746
      %v752 = vunpack.c.h.bf16 %v746
      %v753 = vunpack.c.l.bf16 %v747
      %v754 = vpack.c.bf16 %v740, %v739
      %755 = vmatprep.subr.bf16.mxu0 %v530
      %756 = vmatpush1.bf16.msra.mxu0 %v529
      %757 = vmatprep.subr.bf16.mxu0 %v532
      %758 = vmatpush1.bf16.msra.mxu0 %v531
      %759 = vmatprep.subr.bf16.mxu0 %v534
      %760 = vmatpush1.bf16.msra.mxu0 %v533
      %761 = vmatprep.subr.bf16.mxu0 %v536
      %762 = vmatpush1.bf16.msra.mxu0 %v535
      %763 = vmatprep.subr.bf16.mxu0 %v538
      %764 = vmatpush1.bf16.msra.mxu0 %v537
      %765 = vmatprep.subr.bf16.mxu0 %v540
      %766 = vmatpush1.bf16.msra.mxu0 %v539
      %767 = vmatprep.subr.bf16.mxu0 %v542
      %768 = vmatpush1.bf16.msra.mxu0 %v541
      %769 = vmatprep.subr.bf16.mxu0 %v544
      %770 = vmatpush1.bf16.msra.mxu0 %v543
      %771 = vmatprep.subr.bf16.mxu0 0
      %772 = vmatpush1.bf16.msra.mxu0 0
      %773 = vmatprep.subr.bf16.mxu0 0
      %774 = vmatpush1.bf16.msra.mxu0 0
      %775 = vmatprep.subr.bf16.mxu0 0
      %776 = vmatpush1.bf16.msra.mxu0 0
      %777 = vmatprep.subr.bf16.mxu0 0
      %778 = vmatpush1.bf16.msra.mxu0 0
      %779 = vmatprep.subr.bf16.mxu0 0
      %780 = vmatpush1.bf16.msra.mxu0 0
      %781 = vmatprep.subr.bf16.mxu0 0
      %782 = vmatpush1.bf16.msra.mxu0 0
      %783 = vmatprep.subr.bf16.mxu0 0
      %784 = vmatpush1.bf16.msra.mxu0 0
      %785 = vmatprep.subr.bf16.mxu0 0
      %786 = vmatpush1.bf16.msra.mxu0 0
      %787 = vmatprep.mubr.bf16.mxu0 0
      %788 = vmatmul.mubr.bf16.gmra.mrb[0].mxu0 %v754
      %v789 = vpop.f32.mrb[0].mxu0
      %v790 = vadd.f32 0.0, %v789
      %v791 = vpop.f32.mrb[0].mxu0
      %v792 = vadd.f32 0.0, %v791
      %v793 = vpop.f32.mrb[0].mxu0
      %v794 = vadd.f32 0.0, %v793
      %v795 = vpop.f32.mrb[0].mxu0
      %v796 = vadd.f32 0.0, %v795
      %797 = vdwg.mxu0
      %v798 = vadd.f32 %v748, %v790
      %v799 = vadd.f32 %v749, %v792
      %v800 = vadd.f32 %v751, %v794
      %v801 = vadd.f32 %v752, %v796
      %v802 = vxor.u32 %v798, 2147483648
      %v803 = vxor.u32 %v799, 2147483648
      %v804 = vxor.u32 %v800, 2147483648
      %v805 = vxor.u32 %v801, 2147483648
      %v806 = vmul.f32 %v802, 1.442695
      %v807 = vpow.pop %v806
      %v808 = vmul.f32 %v803, 1.442695
      %v809 = vpow.pop %v808
      %v810 = vmul.f32 %v804, 1.442695
      %v811 = vpow.pop %v810
      %v812 = vmul.f32 %v805, 1.442695
      %v813 = vpow.pop %v812
      %v814 = vadd.f32 %v807, 1.0
      %v815 = vadd.f32 %v809, 1.0
      %v816 = vadd.f32 %v811, 1.0
      %v817 = vadd.f32 %v813, 1.0
      %v818 = vrcp.pop %v814
      %v819 = vmul.f32 1.0, %v818
      %v820 = vrcp.pop %v815
      %v821 = vmul.f32 1.0, %v820
      %v822 = vrcp.pop %v816
      %v823 = vmul.f32 1.0, %v822
      %v824 = vrcp.pop %v817
      %v825 = vmul.f32 1.0, %v824
      %v826 = vmul.f32 %v821, %v739
      %v827 = vmul.f32 %v825, %v740
      %v828 = vpack.c.bf16 %v827, %v826
      %829 = vmatprep.subr.bf16.mxu0 0
      %830 = vmatpush1.bf16.msra.mxu0 %v545
      %831 = vmatprep.subr.bf16.mxu0 0
      %832 = vmatpush1.bf16.msra.mxu0 %v546
      %833 = vmatprep.subr.bf16.mxu0 0
      %834 = vmatpush1.bf16.msra.mxu0 %v547
      %835 = vmatprep.subr.bf16.mxu0 0
      %836 = vmatpush1.bf16.msra.mxu0 %v548
      %837 = vmatprep.subr.bf16.mxu0 0
      %838 = vmatpush1.bf16.msra.mxu0 %v549
      %839 = vmatprep.subr.bf16.mxu0 0
      %840 = vmatpush1.bf16.msra.mxu0 %v550
      %841 = vmatprep.subr.bf16.mxu0 0
      %842 = vmatpush1.bf16.msra.mxu0 %v551
      %843 = vmatprep.subr.bf16.mxu0 0
      %844 = vmatpush1.bf16.msra.mxu0 %v552
      %845 = vmatprep.subr.bf16.mxu0 0
      %846 = vmatpush1.bf16.msra.mxu0 0
      %847 = vmatprep.subr.bf16.mxu0 0
      %848 = vmatpush1.bf16.msra.mxu0 0
      %849 = vmatprep.subr.bf16.mxu0 0
      %850 = vmatpush1.bf16.msra.mxu0 0
      %851 = vmatprep.subr.bf16.mxu0 0
      %852 = vmatpush1.bf16.msra.mxu0 0
      %853 = vmatprep.subr.bf16.mxu0 0
      %854 = vmatpush1.bf16.msra.mxu0 0
      %855 = vmatprep.subr.bf16.mxu0 0
      %856 = vmatpush1.bf16.msra.mxu0 0
      %857 = vmatprep.subr.bf16.mxu0 0
      %858 = vmatpush1.bf16.msra.mxu0 0
      %859 = vmatprep.subr.bf16.mxu0 0
      %860 = vmatpush1.bf16.msra.mxu0 0
      %861 = vmatprep.mubr.bf16.mxu0 0
      %862 = vmatmul.mubr.bf16.gmra.mrb[0].mxu0 %v828
      %v863 = vpop.f32.mrb[0].mxu0
      %v864 = vadd.f32 0.0, %v863
      %v865 = vpop.f32.mrb[0].mxu0
      %v866 = vpop.f32.mrb[0].mxu0
      %v867 = vadd.f32 0.0, %v866
      %v868 = vpop.f32.mrb[0].mxu0
      %869 = vdwg.mxu0
      %v870 = vadd.f32 %v750, %v864
      %v871 = vadd.f32 %v753, %v867
      %v872 = vtanh.pop %v870
      %v873 = vtanh.pop %v871
      %v874 = vpack.c.bf16 %v873, %v872
      %875 = vmatprep.subr.bf16.mxu0 0
      %876 = vmatpush1.bf16.msra.mxu0 %v553
      %877 = vmatprep.subr.bf16.mxu0 0
      %878 = vmatpush1.bf16.msra.mxu0 %v554
      %879 = vmatprep.subr.bf16.mxu0 0
      %880 = vmatpush1.bf16.msra.mxu0 %v555
      %881 = vmatprep.subr.bf16.mxu0 0
      %882 = vmatpush1.bf16.msra.mxu0 %v556
      %883 = vmatprep.subr.bf16.mxu0 0
      %884 = vmatpush1.bf16.msra.mxu0 %v557
      %885 = vmatprep.subr.bf16.mxu0 0
      %886 = vmatpush1.bf16.msra.mxu0 %v558
      %887 = vmatprep.subr.bf16.mxu0 0
      %888 = vmatpush1.bf16.msra.mxu0 %v559
      %889 = vmatprep.subr.bf16.mxu0 0
      %890 = vmatpush1.bf16.msra.mxu0 %v560
      %891 = vmatprep.subr.bf16.mxu0 0
      %892 = vmatpush1.bf16.msra.mxu0 0
      %893 = vmatprep.subr.bf16.mxu0 0
      %894 = vmatpush1.bf16.msra.mxu0 0
      %895 = vmatprep.subr.bf16.mxu0 0
      %896 = vmatpush1.bf16.msra.mxu0 0
      %897 = vmatprep.subr.bf16.mxu0 0
      %898 = vmatpush1.bf16.msra.mxu0 0
      %899 = vmatprep.subr.bf16.mxu0 0
      %900 = vmatpush1.bf16.msra.mxu0 0
      %901 = vmatprep.subr.bf16.mxu0 0
      %902 = vmatpush1.bf16.msra.mxu0 0
      %903 = vmatprep.subr.bf16.mxu0 0
      %904 = vmatpush1.bf16.msra.mxu0 0
      %905 = vmatprep.subr.bf16.mxu0 0
      %906 = vmatpush1.bf16.msra.mxu0 0
      %907 = vmatprep.mubr.bf16.mxu0 0
      %908 = vmatmul.mubr.bf16.gmra.mrb[0].mxu0 %v874
      %v909 = vpop.f32.mrb[0].mxu0
      %v910 = vadd.f32 0.0, %v909
      %v911 = vpop.f32.mrb[0].mxu0
      %v912 = vpop.f32.mrb[0].mxu0
      %v913 = vadd.f32 0.0, %v912
      %v914 = vpop.f32.mrb[0].mxu0
      %915 = vdwg.mxu0
      %v916 = vmul.f32 %v819, %v739
      %v917 = vmul.f32 %v823, %v740
      %v918 = vsub.f32 1.0, %v819
      %v919 = vsub.f32 1.0, %v823
      %v920 = vmul.f32 %v918, %v910
      %v921 = vmul.f32 %v919, %v913
      %v922 = vadd.f32 %v916, %v920
      %v923 = vadd.f32 %v917, %v921
      %s924 = scalar_lea.vmem %s216, 16
      %925 = vst [vmem:[%s924] sm:$0xff] %v922
      %926 = vst [vmem:[%s924 + $0x8] sm:$0xff] %v923
      %s927 = scalar_lea.vmem %s204, 48
      %v928 = vld [vmem:[%s927] sm:$0xff]
      %v929 = vld [vmem:[%s927 + $0x8] sm:$0xf]
      %v930 = vld [vmem:[%s927 + $0xc] sm:$0xff]
      %v931 = vld [vmem:[%s927 + $0x14] sm:$0xf]
      %v932 = vunpack.c.l.bf16 %v928
      %v933 = vunpack.c.h.bf16 %v928
      %v934 = vunpack.c.l.bf16 %v929
      %v935 = vunpack.c.l.bf16 %v930
      %v936 = vunpack.c.h.bf16 %v930
      %v937 = vunpack.c.l.bf16 %v931
      %v938 = vpack.c.bf16 %v923, %v922
      %939 = vmatprep.subr.bf16.mxu0 %v530
      %940 = vmatpush1.bf16.msra.mxu0 %v529
      %941 = vmatprep.subr.bf16.mxu0 %v532
      %942 = vmatpush1.bf16.msra.mxu0 %v531
      %943 = vmatprep.subr.bf16.mxu0 %v534
      %944 = vmatpush1.bf16.msra.mxu0 %v533
      %945 = vmatprep.subr.bf16.mxu0 %v536
      %946 = vmatpush1.bf16.msra.mxu0 %v535
      %947 = vmatprep.subr.bf16.mxu0 %v538
      %948 = vmatpush1.bf16.msra.mxu0 %v537
      %949 = vmatprep.subr.bf16.mxu0 %v540
      %950 = vmatpush1.bf16.msra.mxu0 %v539
      %951 = vmatprep.subr.bf16.mxu0 %v542
      %952 = vmatpush1.bf16.msra.mxu0 %v541
      %953 = vmatprep.subr.bf16.mxu0 %v544
      %954 = vmatpush1.bf16.msra.mxu0 %v543
      %955 = vmatprep.subr.bf16.mxu0 0
      %956 = vmatpush1.bf16.msra.mxu0 0
      %957 = vmatprep.subr.bf16.mxu0 0
      %958 = vmatpush1.bf16.msra.mxu0 0
      %959 = vmatprep.subr.bf16.mxu0 0
      %960 = vmatpush1.bf16.msra.mxu0 0
      %961 = vmatprep.subr.bf16.mxu0 0
      %962 = vmatpush1.bf16.msra.mxu0 0
      %963 = vmatprep.subr.bf16.mxu0 0
      %964 = vmatpush1.bf16.msra.mxu0 0
      %965 = vmatprep.subr.bf16.mxu0 0
      %966 = vmatpush1.bf16.msra.mxu0 0
      %967 = vmatprep.subr.bf16.mxu0 0
      %968 = vmatpush1.bf16.msra.mxu0 0
      %969 = vmatprep.subr.bf16.mxu0 0
      %970 = vmatpush1.bf16.msra.mxu0 0
      %971 = vmatprep.mubr.bf16.mxu0 0
      %972 = vmatmul.mubr.bf16.gmra.mrb[0].mxu0 %v938
      %v973 = vpop.f32.mrb[0].mxu0
      %v974 = vadd.f32 0.0, %v973
      %v975 = vpop.f32.mrb[0].mxu0
      %v976 = vadd.f32 0.0, %v975
      %v977 = vpop.f32.mrb[0].mxu0
      %v978 = vadd.f32 0.0, %v977
      %v979 = vpop.f32.mrb[0].mxu0
      %v980 = vadd.f32 0.0, %v979
      %981 = vdwg.mxu0
      %v982 = vadd.f32 %v932, %v974
      %v983 = vadd.f32 %v933, %v976
      %v984 = vadd.f32 %v935, %v978
      %v985 = vadd.f32 %v936, %v980
      %v986 = vxor.u32 %v982, 2147483648
      %v987 = vxor.u32 %v983, 2147483648
      %v988 = vxor.u32 %v984, 2147483648
      %v989 = vxor.u32 %v985, 2147483648
      %v990 = vmul.f32 %v986, 1.442695
      %v991 = vpow.pop %v990
      %v992 = vmul.f32 %v987, 1.442695
      %v993 = vpow.pop %v992
      %v994 = vmul.f32 %v988, 1.442695
      %v995 = vpow.pop %v994
      %v996 = vmul.f32 %v989, 1.442695
      %v997 = vpow.pop %v996
      %v998 = vadd.f32 %v991, 1.0
      %v999 = vadd.f32 %v993, 1.0
      %v1000 = vadd.f32 %v995, 1.0
      %v1001 = vadd.f32 %v997, 1.0
      %v1002 = vrcp.pop %v998
      %v1003 = vmul.f32 1.0, %v1002
      %v1004 = vrcp.pop %v999
      %v1005 = vmul.f32 1.0, %v1004
      %v1006 = vrcp.pop %v1000
      %v1007 = vmul.f32 1.0, %v1006
      %v1008 = vrcp.pop %v1001
      %v1009 = vmul.f32 1.0, %v1008
      %v1010 = vmul.f32 %v1005, %v922
      %v1011 = vmul.f32 %v1009, %v923
      %v1012 = vpack.c.bf16 %v1011, %v1010
      %1013 = vmatprep.subr.bf16.mxu0 0
      %1014 = vmatpush1.bf16.msra.mxu0 %v545
      %1015 = vmatprep.subr.bf16.mxu0 0
      %1016 = vmatpush1.bf16.msra.mxu0 %v546
      %1017 = vmatprep.subr.bf16.mxu0 0
      %1018 = vmatpush1.bf16.msra.mxu0 %v547
      %1019 = vmatprep.subr.bf16.mxu0 0
      %1020 = vmatpush1.bf16.msra.mxu0 %v548
      %1021 = vmatprep.subr.bf16.mxu0 0
      %1022 = vmatpush1.bf16.msra.mxu0 %v549
      %1023 = vmatprep.subr.bf16.mxu0 0
      %1024 = vmatpush1.bf16.msra.mxu0 %v550
      %1025 = vmatprep.subr.bf16.mxu0 0
      %1026 = vmatpush1.bf16.msra.mxu0 %v551
      %1027 = vmatprep.subr.bf16.mxu0 0
      %1028 = vmatpush1.bf16.msra.mxu0 %v552
      %1029 = vmatprep.subr.bf16.mxu0 0
      %1030 = vmatpush1.bf16.msra.mxu0 0
      %1031 = vmatprep.subr.bf16.mxu0 0
      %1032 = vmatpush1.bf16.msra.mxu0 0
      %1033 = vmatprep.subr.bf16.mxu0 0
      %1034 = vmatpush1.bf16.msra.mxu0 0
      %1035 = vmatprep.subr.bf16.mxu0 0
      %1036 = vmatpush1.bf16.msra.mxu0 0
      %1037 = vmatprep.subr.bf16.mxu0 0
      %1038 = vmatpush1.bf16.msra.mxu0 0
      %1039 = vmatprep.subr.bf16.mxu0 0
      %1040 = vmatpush1.bf16.msra.mxu0 0
      %1041 = vmatprep.subr.bf16.mxu0 0
      %1042 = vmatpush1.bf16.msra.mxu0 0
      %1043 = vmatprep.subr.bf16.mxu0 0
      %1044 = vmatpush1.bf16.msra.mxu0 0
      %1045 = vmatprep.mubr.bf16.mxu0 0
      %1046 = vmatmul.mubr.bf16.gmra.mrb[0].mxu0 %v1012
      %v1047 = vpop.f32.mrb[0].mxu0
      %v1048 = vadd.f32 0.0, %v1047
      %v1049 = vpop.f32.mrb[0].mxu0
      %v1050 = vpop.f32.mrb[0].mxu0
      %v1051 = vadd.f32 0.0, %v1050
      %v1052 = vpop.f32.mrb[0].mxu0
      %1053 = vdwg.mxu0
      %v1054 = vadd.f32 %v934, %v1048
      %v1055 = vadd.f32 %v937, %v1051
      %v1056 = vtanh.pop %v1054
      %v1057 = vtanh.pop %v1055
      %v1058 = vpack.c.bf16 %v1057, %v1056
      %1059 = vmatprep.subr.bf16.mxu0 0
      %1060 = vmatpush1.bf16.msra.mxu0 %v553
      %1061 = vmatprep.subr.bf16.mxu0 0
      %1062 = vmatpush1.bf16.msra.mxu0 %v554
      %1063 = vmatprep.subr.bf16.mxu0 0
      %1064 = vmatpush1.bf16.msra.mxu0 %v555
      %1065 = vmatprep.subr.bf16.mxu0 0
      %1066 = vmatpush1.bf16.msra.mxu0 %v556
      %1067 = vmatprep.subr.bf16.mxu0 0
      %1068 = vmatpush1.bf16.msra.mxu0 %v557
      %1069 = vmatprep.subr.bf16.mxu0 0
      %1070 = vmatpush1.bf16.msra.mxu0 %v558
      %1071 = vmatprep.subr.bf16.mxu0 0
      %1072 = vmatpush1.bf16.msra.mxu0 %v559
      %1073 = vmatprep.subr.bf16.mxu0 0
      %1074 = vmatpush1.bf16.msra.mxu0 %v560
      %1075 = vmatprep.subr.bf16.mxu0 0
      %1076 = vmatpush1.bf16.msra.mxu0 0
      %1077 = vmatprep.subr.bf16.mxu0 0
      %1078 = vmatpush1.bf16.msra.mxu0 0
      %1079 = vmatprep.subr.bf16.mxu0 0
      %1080 = vmatpush1.bf16.msra.mxu0 0
      %1081 = vmatprep.subr.bf16.mxu0 0
      %1082 = vmatpush1.bf16.msra.mxu0 0
      %1083 = vmatprep.subr.bf16.mxu0 0
      %1084 = vmatpush1.bf16.msra.mxu0 0
      %1085 = vmatprep.subr.bf16.mxu0 0
      %1086 = vmatpush1.bf16.msra.mxu0 0
      %1087 = vmatprep.subr.bf16.mxu0 0
      %1088 = vmatpush1.bf16.msra.mxu0 0
      %1089 = vmatprep.subr.bf16.mxu0 0
      %1090 = vmatpush1.bf16.msra.mxu0 0
      %1091 = vmatprep.mubr.bf16.mxu0 0
      %1092 = vmatmul.mubr.bf16.gmra.mrb[0].mxu0 %v1058
      %v1093 = vpop.f32.mrb[0].mxu0
      %v1094 = vadd.f32 0.0, %v1093
      %v1095 = vpop.f32.mrb[0].mxu0
      %v1096 = vpop.f32.mrb[0].mxu0
      %v1097 = vadd.f32 0.0, %v1096
      %v1098 = vpop.f32.mrb[0].mxu0
      %1099 = vdwg.mxu0
      %v1100 = vmul.f32 %v1003, %v922
      %v1101 = vmul.f32 %v1007, %v923
      %v1102 = vsub.f32 1.0, %v1003
      %v1103 = vsub.f32 1.0, %v1007
      %v1104 = vmul.f32 %v1102, %v1094
      %v1105 = vmul.f32 %v1103, %v1097
      %v1106 = vadd.f32 %v1100, %v1104
      %v1107 = vadd.f32 %v1101, %v1105
      %s1108 = scalar_lea.vmem %s216, 32
      %1109 = vst [vmem:[%s1108] sm:$0xff] %v1106
      %1110 = vst [vmem:[%s1108 + $0x8] sm:$0xff] %v1107
      %s1111 = scalar_lea.vmem %s204, 72
      %v1112 = vld [vmem:[%s1111] sm:$0xff]
      %v1113 = vld [vmem:[%s1111 + $0x8] sm:$0xf]
      %v1114 = vld [vmem:[%s1111 + $0xc] sm:$0xff]
      %v1115 = vld [vmem:[%s1111 + $0x14] sm:$0xf]
      %v1116 = vunpack.c.l.bf16 %v1112
      %v1117 = vunpack.c.h.bf16 %v1112
      %v1118 = vunpack.c.l.bf16 %v1113
      %v1119 = vunpack.c.l.bf16 %v1114
      %v1120 = vunpack.c.h.bf16 %v1114
      %v1121 = vunpack.c.l.bf16 %v1115
      %v1122 = vpack.c.bf16 %v1107, %v1106
      %1123 = vmatprep.subr.bf16.mxu0 %v530
      %1124 = vmatpush1.bf16.msra.mxu0 %v529
      %1125 = vmatprep.subr.bf16.mxu0 %v532
      %1126 = vmatpush1.bf16.msra.mxu0 %v531
      %1127 = vmatprep.subr.bf16.mxu0 %v534
      %1128 = vmatpush1.bf16.msra.mxu0 %v533
      %1129 = vmatprep.subr.bf16.mxu0 %v536
      %1130 = vmatpush1.bf16.msra.mxu0 %v535
      %1131 = vmatprep.subr.bf16.mxu0 %v538
      %1132 = vmatpush1.bf16.msra.mxu0 %v537
      %1133 = vmatprep.subr.bf16.mxu0 %v540
      %1134 = vmatpush1.bf16.msra.mxu0 %v539
      %1135 = vmatprep.subr.bf16.mxu0 %v542
      %1136 = vmatpush1.bf16.msra.mxu0 %v541
      %1137 = vmatprep.subr.bf16.mxu0 %v544
      %1138 = vmatpush1.bf16.msra.mxu0 %v543
      %1139 = vmatprep.subr.bf16.mxu0 0
      %1140 = vmatpush1.bf16.msra.mxu0 0
      %1141 = vmatprep.subr.bf16.mxu0 0
      %1142 = vmatpush1.bf16.msra.mxu0 0
      %1143 = vmatprep.subr.bf16.mxu0 0
      %1144 = vmatpush1.bf16.msra.mxu0 0
      %1145 = vmatprep.subr.bf16.mxu0 0
      %1146 = vmatpush1.bf16.msra.mxu0 0
      %1147 = vmatprep.subr.bf16.mxu0 0
      %1148 = vmatpush1.bf16.msra.mxu0 0
      %1149 = vmatprep.subr.bf16.mxu0 0
      %1150 = vmatpush1.bf16.msra.mxu0 0
      %1151 = vmatprep.subr.bf16.mxu0 0
      %1152 = vmatpush1.bf16.msra.mxu0 0
      %1153 = vmatprep.subr.bf16.mxu0 0
      %1154 = vmatpush1.bf16.msra.mxu0 0
      %1155 = vmatprep.mubr.bf16.mxu0 0
      %1156 = vmatmul.mubr.bf16.gmra.mrb[0].mxu0 %v1122
      %v1157 = vpop.f32.mrb[0].mxu0
      %v1158 = vadd.f32 0.0, %v1157
      %v1159 = vpop.f32.mrb[0].mxu0
      %v1160 = vadd.f32 0.0, %v1159
      %v1161 = vpop.f32.mrb[0].mxu0
      %v1162 = vadd.f32 0.0, %v1161
      %v1163 = vpop.f32.mrb[0].mxu0
      %v1164 = vadd.f32 0.0, %v1163
      %1165 = vdwg.mxu0
      %v1166 = vadd.f32 %v1116, %v1158
      %v1167 = vadd.f32 %v1117, %v1160
      %v1168 = vadd.f32 %v1119, %v1162
      %v1169 = vadd.f32 %v1120, %v1164
      %v1170 = vxor.u32 %v1166, 2147483648
      %v1171 = vxor.u32 %v1167, 2147483648
      %v1172 = vxor.u32 %v1168, 2147483648
      %v1173 = vxor.u32 %v1169, 2147483648
      %v1174 = vmul.f32 %v1170, 1.442695
      %v1175 = vpow.pop %v1174
      %v1176 = vmul.f32 %v1171, 1.442695
      %v1177 = vpow.pop %v1176
      %v1178 = vmul.f32 %v1172, 1.442695
      %v1179 = vpow.pop %v1178
      %v1180 = vmul.f32 %v1173, 1.442695
      %v1181 = vpow.pop %v1180
      %v1182 = vadd.f32 %v1175, 1.0
      %v1183 = vadd.f32 %v1177, 1.0
      %v1184 = vadd.f32 %v1179, 1.0
      %v1185 = vadd.f32 %v1181, 1.0
      %v1186 = vrcp.pop %v1182
      %v1187 = vmul.f32 1.0, %v1186
      %v1188 = vrcp.pop %v1183
      %v1189 = vmul.f32 1.0, %v1188
      %v1190 = vrcp.pop %v1184
      %v1191 = vmul.f32 1.0, %v1190
      %v1192 = vrcp.pop %v1185
      %v1193 = vmul.f32 1.0, %v1192
      %v1194 = vmul.f32 %v1189, %v1106
      %v1195 = vmul.f32 %v1193, %v1107
      %v1196 = vpack.c.bf16 %v1195, %v1194
      %1197 = vmatprep.subr.bf16.mxu0 0
      %1198 = vmatpush1.bf16.msra.mxu0 %v545
      %1199 = vmatprep.subr.bf16.mxu0 0
      %1200 = vmatpush1.bf16.msra.mxu0 %v546
      %1201 = vmatprep.subr.bf16.mxu0 0
      %1202 = vmatpush1.bf16.msra.mxu0 %v547
      %1203 = vmatprep.subr.bf16.mxu0 0
      %1204 = vmatpush1.bf16.msra.mxu0 %v548
      %1205 = vmatprep.subr.bf16.mxu0 0
      %1206 = vmatpush1.bf16.msra.mxu0 %v549
      %1207 = vmatprep.subr.bf16.mxu0 0
      %1208 = vmatpush1.bf16.msra.mxu0 %v550
      %1209 = vmatprep.subr.bf16.mxu0 0
      %1210 = vmatpush1.bf16.msra.mxu0 %v551
      %1211 = vmatprep.subr.bf16.mxu0 0
      %1212 = vmatpush1.bf16.msra.mxu0 %v552
      %1213 = vmatprep.subr.bf16.mxu0 0
      %1214 = vmatpush1.bf16.msra.mxu0 0
      %1215 = vmatprep.subr.bf16.mxu0 0
      %1216 = vmatpush1.bf16.msra.mxu0 0
      %1217 = vmatprep.subr.bf16.mxu0 0
      %1218 = vmatpush1.bf16.msra.mxu0 0
      %1219 = vmatprep.subr.bf16.mxu0 0
      %1220 = vmatpush1.bf16.msra.mxu0 0
      %1221 = vmatprep.subr.bf16.mxu0 0
      %1222 = vmatpush1.bf16.msra.mxu0 0
      %1223 = vmatprep.subr.bf16.mxu0 0
      %1224 = vmatpush1.bf16.msra.mxu0 0
      %1225 = vmatprep.subr.bf16.mxu0 0
      %1226 = vmatpush1.bf16.msra.mxu0 0
      %1227 = vmatprep.subr.bf16.mxu0 0
      %1228 = vmatpush1.bf16.msra.mxu0 0
      %1229 = vmatprep.mubr.bf16.mxu0 0
      %1230 = vmatmul.mubr.bf16.gmra.mrb[0].mxu0 %v1196
      %v1231 = vpop.f32.mrb[0].mxu0
      %v1232 = vadd.f32 0.0, %v1231
      %v1233 = vpop.f32.mrb[0].mxu0
      %v1234 = vpop.f32.mrb[0].mxu0
      %v1235 = vadd.f32 0.0, %v1234
      %v1236 = vpop.f32.mrb[0].mxu0
      %1237 = vdwg.mxu0
      %v1238 = vadd.f32 %v1118, %v1232
      %v1239 = vadd.f32 %v1121, %v1235
      %v1240 = vtanh.pop %v1238
      %v1241 = vtanh.pop %v1239
      %v1242 = vpack.c.bf16 %v1241, %v1240
      %1243 = vmatprep.subr.bf16.mxu0 0
      %1244 = vmatpush1.bf16.msra.mxu0 %v553
      %1245 = vmatprep.subr.bf16.mxu0 0
      %1246 = vmatpush1.bf16.msra.mxu0 %v554
      %1247 = vmatprep.subr.bf16.mxu0 0
      %1248 = vmatpush1.bf16.msra.mxu0 %v555
      %1249 = vmatprep.subr.bf16.mxu0 0
      %1250 = vmatpush1.bf16.msra.mxu0 %v556
      %1251 = vmatprep.subr.bf16.mxu0 0
      %1252 = vmatpush1.bf16.msra.mxu0 %v557
      %1253 = vmatprep.subr.bf16.mxu0 0
      %1254 = vmatpush1.bf16.msra.mxu0 %v558
      %1255 = vmatprep.subr.bf16.mxu0 0
      %1256 = vmatpush1.bf16.msra.mxu0 %v559
      %1257 = vmatprep.subr.bf16.mxu0 0
      %1258 = vmatpush1.bf16.msra.mxu0 %v560
      %1259 = vmatprep.subr.bf16.mxu0 0
      %1260 = vmatpush1.bf16.msra.mxu0 0
      %1261 = vmatprep.subr.bf16.mxu0 0
      %1262 = vmatpush1.bf16.msra.mxu0 0
      %1263 = vmatprep.subr.bf16.mxu0 0
      %1264 = vmatpush1.bf16.msra.mxu0 0
      %1265 = vmatprep.subr.bf16.mxu0 0
      %1266 = vmatpush1.bf16.msra.mxu0 0
      %1267 = vmatprep.subr.bf16.mxu0 0
      %1268 = vmatpush1.bf16.msra.mxu0 0
      %1269 = vmatprep.subr.bf16.mxu0 0
      %1270 = vmatpush1.bf16.msra.mxu0 0
      %1271 = vmatprep.subr.bf16.mxu0 0
      %1272 = vmatpush1.bf16.msra.mxu0 0
      %1273 = vmatprep.subr.bf16.mxu0 0
      %1274 = vmatpush1.bf16.msra.mxu0 0
      %1275 = vmatprep.mubr.bf16.mxu0 0
      %1276 = vmatmul.mubr.bf16.gmra.mrb[0].mxu0 %v1242
      %v1277 = vpop.f32.mrb[0].mxu0
      %v1278 = vadd.f32 0.0, %v1277
      %v1279 = vpop.f32.mrb[0].mxu0
      %v1280 = vpop.f32.mrb[0].mxu0
      %v1281 = vadd.f32 0.0, %v1280
      %v1282 = vpop.f32.mrb[0].mxu0
      %1283 = vdwg.mxu0
      %v1284 = vmul.f32 %v1187, %v1106
      %v1285 = vmul.f32 %v1191, %v1107
      %v1286 = vsub.f32 1.0, %v1187
      %v1287 = vsub.f32 1.0, %v1191
      %v1288 = vmul.f32 %v1286, %v1278
      %v1289 = vmul.f32 %v1287, %v1281
      %v1290 = vadd.f32 %v1284, %v1288
      %v1291 = vadd.f32 %v1285, %v1289
      %s1292 = scalar_lea.vmem %s216, 48
      %1293 = vst [vmem:[%s1292] sm:$0xff] %v1290
      %1294 = vst [vmem:[%s1292 + $0x8] sm:$0xff] %v1291
      %1295 = vst [vmem:[#allocation2] sm:$0xff] %v1290
      %1296 = vst [vmem:[#allocation2 + $0x8] sm:$0xff] %v1291
      %s1297 = smul.u32 4, %s21
      %s1298 = smul.u32 2, %s20
      %p1299 = scmp.lt.s32.totalorder %s1297, 7
      %s1300 = scalar_select %p1299, %s1297, 7
      %p1301 = scmp.lt.s32.totalorder %s1298, 1
      %s1302 = scalar_select %p1301, %s1298, 1
      %s1303 = smul.addr %s1300, 2
      %s1304 = sadd.s32 %s1302, %s1303
      %s1305 = smul.addr %s1304, 8
      %s1306 = scalar_lea.vmem %s5, %s1305
      // Predicated region
      $region138: #{igru_sequence.3} parent=27 // pred_check
        %p1307 = pneg %p102
      $region139: #{igru_sequence.3} parent=27 // pred_check_branch
        %1309 = sbr.rel (%p1307) target = $region141
      $region140: #{igru_sequence.3} parent=27 // pred_region
        %s1310 = smul.u32 4, %s21
        %s1311 = smul.u32 2, %s20
      $region141: #{igru_sequence.3} parent=27 // pred_fallthru
        _
    $region28: #{igru_sequence.3} parent=5 // pred_fallthru
      _
    %p1312 = scmp.le.s32.totalorder 2, %s11
    // Predicated region
    $region142: #{igru_sequence.3} parent=5 // pred_check
      %p1313 = pneg %p1312
    $region143: #{igru_sequence.3} parent=5 // pred_check_branch
      %1315 = sbr.rel (%p1313) target = $region145
    $region144: #{igru_sequence.3} parent=5 // pred_region
      %s1316 = ssub.s32 %s11, 2
      // Predicated region
      $region146: #{igru_sequence.3} parent=144 // pred_check
        %p1317 = pneg %p108
      $region147: #{igru_sequence.3} parent=144 // pred_check_branch
        %1319 = sbr.rel (%p1317) target = $region149
      $region148: #{igru_sequence.3} parent=144 // pred_region
        %s1320 = smul.u32 4, %s23
        %s1321 = smul.u32 2, %s22
        %p1322 = scmp.lt.s32.totalorder %s1320, 7
        %s1323 = scalar_select %p1322, %s1320, 7
        %p1324 = scmp.lt.s32.totalorder %s1321, 1
        %s1325 = scalar_select %p1324, %s1321, 1
        %s1326 = smul.addr %s1323, 2
        %s1327 = sadd.s32 %s1325, %s1326
        %s1328 = smul.addr %s1327, 8
        %s1329 = scalar_lea.vmem %s5, %s1328
      $region149: #{igru_sequence.3} parent=144 // pred_fallthru
        _
    $region145: #{igru_sequence.3} parent=5 // pred_fallthru
      _
  $region6: #{igru_sequence.3} parent=0 // loop_footer
    %s15 = sadd.s32 1, %s11
  $region7: #{igru_sequence.3} parent=0 // loop_footer_branch
    %10 = sbr.rel target = $region3
  $region8: #{igru_sequence.3} parent=0 // loop_exit
    _
  %1330 = vsyncmov [#allocation6]
  %s1331 = vpop.sfrf %1330
  %p1332 = scmp.eq.s32.totalorder %s1331, 0
  %p1333 = pneg %p1332
  %1335 = shalt.err (%p1333)
  %s1336 = scalar_lea.sflag [#allocation6], 1
  %1337 = vsyncmov %s1336
  %s1338 = vpop.sfrf %1337
  %p1339 = scmp.eq.s32.totalorder %s1338, 0
  %p1340 = pneg %p1339
  %1342 = shalt.err (%p1340)
  %s1343 = scalar_lea.sflag [#allocation6], 2
  %1344 = vsyncmov %s1343
  %s1345 = vpop.sfrf %1344
  %p1346 = scmp.eq.s32.totalorder %s1345, 0
  %p1347 = pneg %p1346
  %1349 = shalt.err (%p1347)

</llo_original>
